<compile_context>
chip_gen: v5e
topology: v5e:2x2
jax: 0.10.0
libtpu: 0.0.40
codegen_flags: <defaults>
</compile_context>

<pallas_src>
import math
from functools import partial

import jax
import jax.numpy as jnp
from jax.experimental import pallas as pl
from jax.experimental.pallas import tpu as pltpu

HIDDEN = 300                      # neuron_nums = [300, 300, 300] from the module
HPAD = 384                        # hidden width zero-padded to 3*128 lanes
APAD = 128                        # action width padded to one full lane tile (lane-dense output)
BN_EPS = 1e-5                     # nn.BatchNorm1d default eps
LOG_SQRT_2PI = 0.5 * math.log(2.0 * math.pi)


def _bn_relu(h, gamma, beta, inv_b):
    """BatchNorm1d (training-mode, biased batch stats, two-pass variance) + ReLU.

    Zero-padded columns give mean = var = 0 and gamma/beta pads are 0 -> output stays exactly 0.
    """
    mean = jnp.sum(h, axis=0, keepdims=True) * inv_b
    d = h - mean
    var = jnp.sum(d * d, axis=0, keepdims=True) * inv_b
    return jnp.maximum(d * (jax.lax.rsqrt(var + BN_EPS) * gamma) + beta, 0.0)


def actor_kernel(x_ref, w123_ref, w4_ref, vec_ref, noise_ref, out_ref,
                 *, din, hpad, apad, a, inv_b):
    # packed small vectors: rows = [g1, be1, g2, be2, g3, be3, b4pad, 0]
    v = vec_ref[...]                                   # [8, hpad] f32

    # static, 16-sublane-aligned views into the packed bf16 weight slab
    w1 = w123_ref[0:din, :]                            # [din,  hpad]
    w2 = w123_ref[din:din + hpad, :]                   # [hpad, hpad]
    w3 = w123_ref[din + hpad:din + 2 * hpad, :]        # [hpad, hpad]

    x = x_ref[...].astype(jnp.bfloat16)

    # --- MLP hot path: Linear -> BatchNorm1d -> ReLU (x3). Layer biases b1..b3 are dropped:
    # a per-feature constant added before training-mode BN is cancelled by the mean subtraction.
    h = jnp.dot(x, w1, preferred_element_type=jnp.float32)
    h = _bn_relu(h, v[0:1, :], v[1:2, :], inv_b)

    h = jnp.dot(h.astype(jnp.bfloat16), w2, preferred_element_type=jnp.float32)
    h = _bn_relu(h, v[2:3, :], v[3:4, :], inv_b)

    h = jnp.dot(h.astype(jnp.bfloat16), w3, preferred_element_type=jnp.float32)
    h = _bn_relu(h, v[4:5, :], v[5:6, :], inv_b)

    # final Linear (padded weight cols / bias lanes are 0 -> padded means = tanh(0) = 0) -> Tanh
    means = jnp.tanh(
        jnp.dot(h.astype(jnp.bfloat16), w4_ref[...], preferred_element_type=jnp.float32)
        + v[6:7, 0:apad]
    )

    # --- Normal(means, std=1): reparameterized sample, clamp, log_prob ---
    actions = jnp.clip(means + noise_ref[...], -1.0, 1.0)
    diff = actions - means
    logp = -0.5 * (diff * diff) - LOG_SQRT_2PI          # std = 1 -> log(std) = 0

    # --- ensemble actions: softmax over the real action lanes only
    # (actions clipped to [-1, 1] -> exp is bounded, no max-subtraction needed) ---
    lane = jax.lax.broadcasted_iota(jnp.int32, actions.shape, 1)
    e = jnp.where(lane < a, jnp.exp(actions), 0.0)
    soft = e * pl.reciprocal(jnp.sum(e, axis=-1, keepdims=True), approx=False)

    # --- merged, lane-dense output block: [3, B, apad] = {actions, logprobs, softmax} ---
    out_ref[0, :, :] = actions
    out_ref[1, :, :] = logp
    out_ref[2, :, :] = soft


@jax.jit
def continuous_actor_forward(x, packed, noise):
    """x: [G, B, D_in] f32, packed: dict from pack_params(), noise: [G, B, A] f32 (std-normal).

    Each group g is one independent forward pass of the module (BatchNorm stats per group).
    """
    G, B, d_in = x.shape
    a = noise.shape[-1]
    hpad = packed["w4"].shape[0]
    apad = packed["w4"].shape[1]
    din_pad = packed["w123"].shape[0] - 2 * hpad
    if d_in < din_pad:                                  # static (shape-derived) under jit
        x = jnp.pad(x, ((0, 0), (0, 0), (0, din_pad - d_in)))
    noise_p = jnp.pad(noise, ((0, 0), (0, 0), (0, apad - a)))   # tiny; keeps kernel lane-dense

    kernel = partial(actor_kernel, din=din_pad, hpad=hpad, apad=apad, a=a, inv_b=1.0 / B)

    # advisory cost hints for XLA's scheduler (all Python ints from static shapes)
    flops = 2 * G * B * (din_pad * hpad + 2 * hpad * hpad + hpad * apad)
    transcendentals = G * (3 * hpad + 2 * B * apad + B)
    bytes_accessed = (packed["w123"].size * 2 + packed["w4"].size * 2 + packed["vecs"].size * 4
                      + x.size * 4 + noise_p.size * 4 + G * 3 * B * apad * 4)

    out = pl.pallas_call(
        kernel,
        out_shape=jax.ShapeDtypeStruct((G, 3, B, apad), jnp.float32),
        grid=(G,),
        in_specs=[
            pl.BlockSpec((None, B, din_pad), lambda g: (g, 0, 0)),             # x: streamed/group
            pl.BlockSpec((packed["w123"].shape[0], hpad), lambda g: (0, 0)),   # weights: resident
            pl.BlockSpec((hpad, apad), lambda g: (0, 0)),                      # w4: resident
            pl.BlockSpec((packed["vecs"].shape[0], hpad), lambda g: (0, 0)),   # vecs: resident
            pl.BlockSpec((None, B, apad), lambda g: (g, 0, 0)),                # noise: streamed
        ],
        out_specs=pl.BlockSpec((None, 3, B, apad), lambda g: (g, 0, 0, 0)),
        compiler_params=pltpu.CompilerParams(dimension_semantics=("parallel",)),
        cost_estimate=pl.CostEstimate(flops=flops, transcendentals=transcendentals,
                                      bytes_accessed=bytes_accessed),
    )(x, packed["w123"], packed["w4"], packed["vecs"], noise_p)

    # slice the padded lanes off outside the kernel
    return out[:, 0, :, :a], out[:, 1, :, :a], out[:, 2, :, :a]


def init_params(key, input_dims, action_dims):
    """Deterministic synthetic parameters matching the module's shapes (weights pre-transposed)."""
    dims = [input_dims, HIDDEN, HIDDEN, HIDDEN, action_dims]
    params = {}
    for i in range(4):
        key, kw, kb = jax.random.split(key, 3)
        bound = 1.0 / math.sqrt(dims[i])
        params[f"w{i+1}"] = jax.random.uniform(kw, (dims[i], dims[i + 1]), jnp.float32, -bound, bound)
        params[f"b{i+1}"] = jax.random.uniform(kb, (1, dims[i + 1]), jnp.float32, -bound, bound)
    # BatchNorm affine params; randomized (instead of gamma=1/beta=0) so they are exercised.
    for i in range(1, 4):
        key, kg, kb2 = jax.random.split(key, 3)
        params[f"g{i}"] = jax.random.uniform(kg, (1, HIDDEN), jnp.float32, 0.5, 1.5)
        params[f"be{i}"] = jax.random.uniform(kb2, (1, HIDDEN), jnp.float32, -0.2, 0.2)
    return params


def pack_params(params):
    """One-time packing/padding (do NOT re-pack per call): bf16 weight slabs + f32 vector slab.

    Layer-1..3 biases are intentionally NOT packed: training-mode BatchNorm cancels them exactly.
    """
    d_in = params["w1"].shape[0]
    din_pad = max(16, ((d_in + 15) // 16) * 16)         # bf16 sublane tile = 16

    def padw(w, rows, cols):
        return jnp.pad(w, ((0, rows - w.shape[0]), (0, cols - w.shape[1])))

    w123 = jnp.concatenate(
        [padw(params["w1"], din_pad, HPAD),
         padw(params["w2"], HPAD, HPAD),
         padw(params["w3"], HPAD, HPAD)], axis=0).astype(jnp.bfloat16)      # [din_pad+768, 384]
    w4 = padw(params["w4"], HPAD, APAD).astype(jnp.bfloat16)                # [384, 128]

    def padv(vec):
        return jnp.pad(vec, ((0, 0), (0, HPAD - vec.shape[1])))

    vecs = jnp.concatenate(
        [padv(params["g1"]), padv(params["be1"]),
         padv(params["g2"]), padv(params["be2"]),
         padv(params["g3"]), padv(params["be3"]),
         padv(params["b4"]),
         jnp.zeros((1, HPAD), jnp.float32)], axis=0).astype(jnp.float32)    # [8, 384]

    return {"w123": w123, "w4": w4, "vecs": vecs}


def reference_forward(x, params, noise):
    """Pure-JAX reference with PyTorch semantics (same bf16 matmul casts, biases included)."""
    h = x
    for i in range(1, 4):
        h = jnp.dot(h.astype(jnp.bfloat16), params[f"w{i}"].astype(jnp.bfloat16),
                    preferred_element_type=jnp.float32) + params[f"b{i}"]
        mean = jnp.mean(h, axis=0, keepdims=True)
        var = jnp.mean((h - mean) ** 2, axis=0, keepdims=True)              # biased variance
        h = (h - mean) * jax.lax.rsqrt(var + BN_EPS) * params[f"g{i}"] + params[f"be{i}"]
        h = jnp.maximum(h, 0.0)
    means = jnp.tanh(jnp.dot(h.astype(jnp.bfloat16), params["w4"].astype(jnp.bfloat16),
                             preferred_element_type=jnp.float32) + params["b4"])
    actions = jnp.clip(means + noise, -1.0, 1.0)
    logp = -0.5 * (actions - means) ** 2 - LOG_SQRT_2PI
    soft = jax.nn.softmax(actions, axis=-1)
    return actions, logp, soft


if __name__ == "__main__":
    input_dims = 16
    action_dims = 8
    batch = 4
    groups = 2     # independent forward passes fused into one launch; weights stay VMEM-resident

    key = jax.random.PRNGKey(0)
    k_params, k_x, k_noise = jax.random.split(key, 3)

    params = init_params(k_params, input_dims, action_dims)
    packed = pack_params(params)                         # packed once, reused across calls

    x = jax.random.normal(k_x, (groups, batch, input_dims), jnp.float32)
    noise = jax.random.normal(k_noise, (groups, batch, action_dims), jnp.float32)

    c_actions, c_logprobs, ensemble_c_actions = jax.block_until_ready(
        continuous_actor_forward(x, packed, noise)
    )

    # reference: one module forward per group (BatchNorm batch stats per group)
    r_actions, r_logprobs, r_ensemble = jax.vmap(
        lambda xg, ng: reference_forward(xg, params, ng))(x, noise)

    assert c_actions.shape == (groups, batch, action_dims)
    assert c_logprobs.shape == (groups, batch, action_dims)
    assert ensemble_c_actions.shape == (groups, batch, action_dims)
    assert bool(jnp.all(jnp.isfinite(c_actions)))
    assert bool(jnp.all(jnp.isfinite(c_logprobs)))
    assert bool(jnp.all(jnp.isfinite(ensemble_c_actions)))
    # softmax rows sum to 1 (exact reciprocal used in-kernel)
    assert bool(jnp.allclose(jnp.sum(ensemble_c_actions, axis=-1), 1.0, atol=1e-5))
    # matches the pure-JAX reference of the module's forward
    assert bool(jnp.allclose(c_actions, r_actions, atol=2e-3, rtol=2e-3))
    assert bool(jnp.allclose(c_logprobs, r_logprobs, atol=2e-3, rtol=2e-3))
    assert bool(jnp.allclose(ensemble_c_actions, r_ensemble, atol=2e-3, rtol=2e-3))

    print("KERNEL_OK")
</pallas_src>

<mosaic_0001>
module attributes {stable_mosaic.version = 11 : i64} {
  func.func @actor_kernel(%arg0: i32, %arg1: memref<1x4x16xf32, #tpu.memory_space<vmem>>, %arg2: memref<784x384xbf16, #tpu.memory_space<vmem>>, %arg3: memref<384x128xbf16, #tpu.memory_space<vmem>>, %arg4: memref<8x384xf32, #tpu.memory_space<vmem>>, %arg5: memref<1x4x128xf32, #tpu.memory_space<vmem>>, %arg6: memref<1x3x4x128xf32, #tpu.memory_space<vmem>>) attributes {dimension_semantics = [#tpu.dimension_semantics<parallel>], iteration_bounds = array<i64: 2>, scalar_prefetch = 0 : i64, scratch_operands = 0 : i64, tpu.core_type = #tpu.core_type<tc>, window_params = [{transform_indices = @transform_0, window_bounds = array<i64: 1, 4, 16>}, {pipeline_mode = #tpu.pipeline_mode<synchronous>, transform_indices = @transform_1, window_bounds = array<i64: 784, 384>}, {pipeline_mode = #tpu.pipeline_mode<synchronous>, transform_indices = @transform_2, window_bounds = array<i64: 384, 128>}, {pipeline_mode = #tpu.pipeline_mode<synchronous>, transform_indices = @transform_3, window_bounds = array<i64: 8, 384>}, {transform_indices = @transform_4, window_bounds = array<i64: 1, 4, 128>}, {transform_indices = @transform_5, window_bounds = array<i64: 1, 3, 4, 128>}]} {
    %c0 = arith.constant 0 : index
    %c0_0 = arith.constant 0 : index
    %0 = vector.load %arg4[%c0, %c0_0] : memref<8x384xf32, #tpu.memory_space<vmem>>, vector<8x384xf32>
    %c0_1 = arith.constant 0 : index
    %c0_2 = arith.constant 0 : index
    %1 = vector.load %arg2[%c0_1, %c0_2] : memref<784x384xbf16, #tpu.memory_space<vmem>>, vector<16x384xbf16>
    %c16 = arith.constant 16 : index
    %c0_3 = arith.constant 0 : index
    %2 = vector.load %arg2[%c16, %c0_3] : memref<784x384xbf16, #tpu.memory_space<vmem>>, vector<384x384xbf16>
    %c400 = arith.constant 400 : index
    %c0_4 = arith.constant 0 : index
    %3 = vector.load %arg2[%c400, %c0_4] : memref<784x384xbf16, #tpu.memory_space<vmem>>, vector<384x384xbf16>
    %c0_5 = arith.constant 0 : index
    %c0_6 = arith.constant 0 : index
    %c0_7 = arith.constant 0 : index
    %4 = vector.load %arg1[%c0_5, %c0_6, %c0_7] : memref<1x4x16xf32, #tpu.memory_space<vmem>>, vector<1x4x16xf32>
    %5 = vector.shape_cast %4 : vector<1x4x16xf32> to vector<4x16xf32>
    %6 = arith.truncf %5 : vector<4x16xf32> to vector<4x16xbf16>
    %cst = arith.constant dense<0.000000e+00> : vector<4x384xf32>
    %7 = tpu.matmul %6, %1, %cst {dimension_numbers = #tpu.dot_dimension_numbers<[1], [0], [0], [1], [0, 0, 1, 1], [], []>} : vector<4x16xbf16>, vector<16x384xbf16>, vector<4x384xf32> -> vector<4x384xf32>
    %8 = vector.extract_strided_slice %0 {offsets = [0, 0], sizes = [1, 384], strides = [1, 1]} : vector<8x384xf32> to vector<1x384xf32>
    %9 = vector.extract_strided_slice %0 {offsets = [1, 0], sizes = [1, 384], strides = [1, 1]} : vector<8x384xf32> to vector<1x384xf32>
    %cst_8 = arith.constant dense<0.000000e+00> : vector<384xf32>
    %10 = vector.multi_reduction <add>, %7, %cst_8 [0] : vector<4x384xf32> to vector<384xf32>
    %11 = vector.shape_cast %10 : vector<384xf32> to vector<1x384xf32>
    %cst_9 = arith.constant 2.500000e-01 : f32
    %12 = vector.broadcast %cst_9 : f32 to vector<1x384xf32>
    %13 = arith.mulf %11, %12 : vector<1x384xf32>
    %14 = vector.broadcast %13 : vector<1x384xf32> to vector<4x384xf32>
    %15 = arith.subf %7, %14 : vector<4x384xf32>
    %16 = arith.mulf %15, %15 : vector<4x384xf32>
    %cst_10 = arith.constant dense<0.000000e+00> : vector<384xf32>
    %17 = vector.multi_reduction <add>, %16, %cst_10 [0] : vector<4x384xf32> to vector<384xf32>
    %18 = vector.shape_cast %17 : vector<384xf32> to vector<1x384xf32>
    %cst_11 = arith.constant 2.500000e-01 : f32
    %19 = vector.broadcast %cst_11 : f32 to vector<1x384xf32>
    %20 = arith.mulf %18, %19 : vector<1x384xf32>
    %cst_12 = arith.constant 9.99999974E-6 : f32
    %21 = vector.broadcast %cst_12 : f32 to vector<1x384xf32>
    %22 = arith.addf %20, %21 : vector<1x384xf32>
    %23 = math.rsqrt %22 : vector<1x384xf32>
    %24 = arith.mulf %23, %8 : vector<1x384xf32>
    %25 = vector.broadcast %24 : vector<1x384xf32> to vector<4x384xf32>
    %26 = arith.mulf %15, %25 : vector<4x384xf32>
    %27 = vector.broadcast %9 : vector<1x384xf32> to vector<4x384xf32>
    %28 = arith.addf %26, %27 : vector<4x384xf32>
    %cst_13 = arith.constant 0.000000e+00 : f32
    %29 = vector.broadcast %cst_13 : f32 to vector<4x384xf32>
    %30 = arith.maximumf %28, %29 : vector<4x384xf32>
    %31 = arith.truncf %30 : vector<4x384xf32> to vector<4x384xbf16>
    %cst_14 = arith.constant dense<0.000000e+00> : vector<4x384xf32>
    %32 = tpu.matmul %31, %2, %cst_14 {dimension_numbers = #tpu.dot_dimension_numbers<[1], [0], [0], [1], [0, 0, 1, 1], [], []>} : vector<4x384xbf16>, vector<384x384xbf16>, vector<4x384xf32> -> vector<4x384xf32>
    %33 = vector.extract_strided_slice %0 {offsets = [2, 0], sizes = [1, 384], strides = [1, 1]} : vector<8x384xf32> to vector<1x384xf32>
    %34 = vector.extract_strided_slice %0 {offsets = [3, 0], sizes = [1, 384], strides = [1, 1]} : vector<8x384xf32> to vector<1x384xf32>
    %cst_15 = arith.constant dense<0.000000e+00> : vector<384xf32>
    %35 = vector.multi_reduction <add>, %32, %cst_15 [0] : vector<4x384xf32> to vector<384xf32>
    %36 = vector.shape_cast %35 : vector<384xf32> to vector<1x384xf32>
    %cst_16 = arith.constant 2.500000e-01 : f32
    %37 = vector.broadcast %cst_16 : f32 to vector<1x384xf32>
    %38 = arith.mulf %36, %37 : vector<1x384xf32>
    %39 = vector.broadcast %38 : vector<1x384xf32> to vector<4x384xf32>
    %40 = arith.subf %32, %39 : vector<4x384xf32>
    %41 = arith.mulf %40, %40 : vector<4x384xf32>
    %cst_17 = arith.constant dense<0.000000e+00> : vector<384xf32>
    %42 = vector.multi_reduction <add>, %41, %cst_17 [0] : vector<4x384xf32> to vector<384xf32>
    %43 = vector.shape_cast %42 : vector<384xf32> to vector<1x384xf32>
    %cst_18 = arith.constant 2.500000e-01 : f32
    %44 = vector.broadcast %cst_18 : f32 to vector<1x384xf32>
    %45 = arith.mulf %43, %44 : vector<1x384xf32>
    %cst_19 = arith.constant 9.99999974E-6 : f32
    %46 = vector.broadcast %cst_19 : f32 to vector<1x384xf32>
    %47 = arith.addf %45, %46 : vector<1x384xf32>
    %48 = math.rsqrt %47 : vector<1x384xf32>
    %49 = arith.mulf %48, %33 : vector<1x384xf32>
    %50 = vector.broadcast %49 : vector<1x384xf32> to vector<4x384xf32>
    %51 = arith.mulf %40, %50 : vector<4x384xf32>
    %52 = vector.broadcast %34 : vector<1x384xf32> to vector<4x384xf32>
    %53 = arith.addf %51, %52 : vector<4x384xf32>
    %cst_20 = arith.constant 0.000000e+00 : f32
    %54 = vector.broadcast %cst_20 : f32 to vector<4x384xf32>
    %55 = arith.maximumf %53, %54 : vector<4x384xf32>
    %56 = arith.truncf %55 : vector<4x384xf32> to vector<4x384xbf16>
    %cst_21 = arith.constant dense<0.000000e+00> : vector<4x384xf32>
    %57 = tpu.matmul %56, %3, %cst_21 {dimension_numbers = #tpu.dot_dimension_numbers<[1], [0], [0], [1], [0, 0, 1, 1], [], []>} : vector<4x384xbf16>, vector<384x384xbf16>, vector<4x384xf32> -> vector<4x384xf32>
    %58 = vector.extract_strided_slice %0 {offsets = [4, 0], sizes = [1, 384], strides = [1, 1]} : vector<8x384xf32> to vector<1x384xf32>
    %59 = vector.extract_strided_slice %0 {offsets = [5, 0], sizes = [1, 384], strides = [1, 1]} : vector<8x384xf32> to vector<1x384xf32>
    %cst_22 = arith.constant dense<0.000000e+00> : vector<384xf32>
    %60 = vector.multi_reduction <add>, %57, %cst_22 [0] : vector<4x384xf32> to vector<384xf32>
    %61 = vector.shape_cast %60 : vector<384xf32> to vector<1x384xf32>
    %cst_23 = arith.constant 2.500000e-01 : f32
    %62 = vector.broadcast %cst_23 : f32 to vector<1x384xf32>
    %63 = arith.mulf %61, %62 : vector<1x384xf32>
    %64 = vector.broadcast %63 : vector<1x384xf32> to vector<4x384xf32>
    %65 = arith.subf %57, %64 : vector<4x384xf32>
    %66 = arith.mulf %65, %65 : vector<4x384xf32>
    %cst_24 = arith.constant dense<0.000000e+00> : vector<384xf32>
    %67 = vector.multi_reduction <add>, %66, %cst_24 [0] : vector<4x384xf32> to vector<384xf32>
    %68 = vector.shape_cast %67 : vector<384xf32> to vector<1x384xf32>
    %cst_25 = arith.constant 2.500000e-01 : f32
    %69 = vector.broadcast %cst_25 : f32 to vector<1x384xf32>
    %70 = arith.mulf %68, %69 : vector<1x384xf32>
    %cst_26 = arith.constant 9.99999974E-6 : f32
    %71 = vector.broadcast %cst_26 : f32 to vector<1x384xf32>
    %72 = arith.addf %70, %71 : vector<1x384xf32>
    %73 = math.rsqrt %72 : vector<1x384xf32>
    %74 = arith.mulf %73, %58 : vector<1x384xf32>
    %75 = vector.broadcast %74 : vector<1x384xf32> to vector<4x384xf32>
    %76 = arith.mulf %65, %75 : vector<4x384xf32>
    %77 = vector.broadcast %59 : vector<1x384xf32> to vector<4x384xf32>
    %78 = arith.addf %76, %77 : vector<4x384xf32>
    %cst_27 = arith.constant 0.000000e+00 : f32
    %79 = vector.broadcast %cst_27 : f32 to vector<4x384xf32>
    %80 = arith.maximumf %78, %79 : vector<4x384xf32>
    %81 = arith.truncf %80 : vector<4x384xf32> to vector<4x384xbf16>
    %c0_28 = arith.constant 0 : index
    %c0_29 = arith.constant 0 : index
    %82 = vector.load %arg3[%c0_28, %c0_29] : memref<384x128xbf16, #tpu.memory_space<vmem>>, vector<384x128xbf16>
    %cst_30 = arith.constant dense<0.000000e+00> : vector<4x128xf32>
    %83 = tpu.matmul %81, %82, %cst_30 {dimension_numbers = #tpu.dot_dimension_numbers<[1], [0], [0], [1], [0, 0, 1, 1], [], []>} : vector<4x384xbf16>, vector<384x128xbf16>, vector<4x128xf32> -> vector<4x128xf32>
    %84 = vector.extract_strided_slice %0 {offsets = [6, 0], sizes = [1, 128], strides = [1, 1]} : vector<8x384xf32> to vector<1x128xf32>
    %85 = vector.broadcast %84 : vector<1x128xf32> to vector<4x128xf32>
    %86 = arith.addf %83, %85 : vector<4x128xf32>
    %87 = math.tanh %86 : vector<4x128xf32>
    %c0_31 = arith.constant 0 : index
    %c0_32 = arith.constant 0 : index
    %c0_33 = arith.constant 0 : index
    %88 = vector.load %arg5[%c0_31, %c0_32, %c0_33] : memref<1x4x128xf32, #tpu.memory_space<vmem>>, vector<1x4x128xf32>
    %89 = vector.shape_cast %88 : vector<1x4x128xf32> to vector<4x128xf32>
    %90 = arith.addf %87, %89 : vector<4x128xf32>
    %cst_34 = arith.constant -1.000000e+00 : f32
    %cst_35 = arith.constant 1.000000e+00 : f32
    %91 = vector.broadcast %cst_34 : f32 to vector<4x128xf32>
    %92 = arith.maximumf %91, %90 : vector<4x128xf32>
    %93 = vector.broadcast %cst_35 : f32 to vector<4x128xf32>
    %94 = arith.minimumf %93, %92 : vector<4x128xf32>
    %95 = arith.subf %94, %87 : vector<4x128xf32>
    %96 = arith.mulf %95, %95 : vector<4x128xf32>
    %cst_36 = arith.constant -5.000000e-01 : f32
    %97 = vector.broadcast %cst_36 : f32 to vector<4x128xf32>
    %98 = arith.mulf %97, %96 : vector<4x128xf32>
    %cst_37 = arith.constant 0.918938517 : f32
    %99 = vector.broadcast %cst_37 : f32 to vector<4x128xf32>
    %100 = arith.subf %98, %99 : vector<4x128xf32>
    %101 = tpu.iota {dimensions = array<i32: 1>} : vector<4x128xi32>
    %c8_i32 = arith.constant 8 : i32
    %102 = vector.broadcast %c8_i32 : i32 to vector<4x128xi32>
    %103 = arith.cmpi slt, %101, %102 : vector<4x128xi32>
    %104 = math.exp %94 : vector<4x128xf32>
    %cst_38 = arith.constant 0.000000e+00 : f32
    %105 = vector.broadcast %cst_38 : f32 to vector<4x128xf32>
    %106 = arith.select %103, %104, %105 : vector<4x128xi1>, vector<4x128xf32>
    %cst_39 = arith.constant dense<0.000000e+00> : vector<4xf32>
    %107 = vector.multi_reduction <add>, %106, %cst_39 [1] : vector<4x128xf32> to vector<4xf32>
    %108 = vector.shape_cast %107 : vector<4xf32> to vector<4x1xf32>
    %109 = tpu.reciprocal %108 : vector<4x1xf32> -> vector<4x1xf32>
    %110 = vector.broadcast %109 : vector<4x1xf32> to vector<4x128xf32>
    %111 = arith.mulf %106, %110 : vector<4x128xf32>
    %c0_40 = arith.constant 0 : index
    %c0_41 = arith.constant 0 : index
    %c0_42 = arith.constant 0 : index
    %c0_43 = arith.constant 0 : index
    %112 = vector.load %arg6[%c0_40, %c0_41, %c0_42, %c0_43] : memref<1x3x4x128xf32, #tpu.memory_space<vmem>>, vector<1x1x4x128xf32>
    %113 = vector.shape_cast %112 : vector<1x1x4x128xf32> to vector<4x128xf32>
    %114 = vector.shape_cast %94 : vector<4x128xf32> to vector<1x1x4x128xf32>
    tpu.vector_store %arg6[%c0_40, %c0_41, %c0_42, %c0_43], %114 {strides = array<i32>} : memref<1x3x4x128xf32, #tpu.memory_space<vmem>>, vector<1x1x4x128xf32>,
    %c0_44 = arith.constant 0 : index
    %c1 = arith.constant 1 : index
    %c0_45 = arith.constant 0 : index
    %c0_46 = arith.constant 0 : index
    %115 = vector.load %arg6[%c0_44, %c1, %c0_45, %c0_46] : memref<1x3x4x128xf32, #tpu.memory_space<vmem>>, vector<1x1x4x128xf32>
    %116 = vector.shape_cast %115 : vector<1x1x4x128xf32> to vector<4x128xf32>
    %117 = vector.shape_cast %100 : vector<4x128xf32> to vector<1x1x4x128xf32>
    tpu.vector_store %arg6[%c0_44, %c1, %c0_45, %c0_46], %117 {strides = array<i32>} : memref<1x3x4x128xf32, #tpu.memory_space<vmem>>, vector<1x1x4x128xf32>,
    %c0_47 = arith.constant 0 : index
    %c2 = arith.constant 2 : index
    %c0_48 = arith.constant 0 : index
    %c0_49 = arith.constant 0 : index
    %118 = vector.load %arg6[%c0_47, %c2, %c0_48, %c0_49] : memref<1x3x4x128xf32, #tpu.memory_space<vmem>>, vector<1x1x4x128xf32>
    %119 = vector.shape_cast %118 : vector<1x1x4x128xf32> to vector<4x128xf32>
    %120 = vector.shape_cast %111 : vector<4x128xf32> to vector<1x1x4x128xf32>
    tpu.vector_store %arg6[%c0_47, %c2, %c0_48, %c0_49], %120 {strides = array<i32>} : memref<1x3x4x128xf32, #tpu.memory_space<vmem>>, vector<1x1x4x128xf32>,
    return
  }
  func.func @transform_0(%arg0: i32) -> (i32, i32, i32) {
    %c0_i32 = arith.constant 0 : i32
    %c0_i32_0 = arith.constant 0 : i32
    %c0_i32_1 = arith.constant 0 : i32
    return %arg0, %c0_i32, %c0_i32_0 : i32, i32, i32
  }
  func.func @transform_1(%arg0: i32) -> (i32, i32) {
    %c0_i32 = arith.constant 0 : i32
    %c0_i32_0 = arith.constant 0 : i32
    %c0_i32_1 = arith.constant 0 : i32
    return %c0_i32, %c0_i32_0 : i32, i32
  }
  func.func @transform_2(%arg0: i32) -> (i32, i32) {
    %c0_i32 = arith.constant 0 : i32
    %c0_i32_0 = arith.constant 0 : i32
    %c0_i32_1 = arith.constant 0 : i32
    return %c0_i32, %c0_i32_0 : i32, i32
  }
  func.func @transform_3(%arg0: i32) -> (i32, i32) {
    %c0_i32 = arith.constant 0 : i32
    %c0_i32_0 = arith.constant 0 : i32
    %c0_i32_1 = arith.constant 0 : i32
    return %c0_i32, %c0_i32_0 : i32, i32
  }
  func.func @transform_4(%arg0: i32) -> (i32, i32, i32) {
    %c0_i32 = arith.constant 0 : i32
    %c0_i32_0 = arith.constant 0 : i32
    %c0_i32_1 = arith.constant 0 : i32
    return %arg0, %c0_i32, %c0_i32_0 : i32, i32, i32
  }
  func.func @transform_5(%arg0: i32) -> (i32, i32, i32, i32) {
    %c0_i32 = arith.constant 0 : i32
    %c0_i32_0 = arith.constant 0 : i32
    %c0_i32_1 = arith.constant 0 : i32
    %c0_i32_2 = arith.constant 0 : i32
    return %arg0, %c0_i32, %c0_i32_0, %c0_i32_1 : i32, i32, i32, i32
  }
}

</mosaic_0001>

<llo_original>
// kernel: continuous_actor_forward.1
$region0: #{continuous_actor_forward.1}
  #allocation0 [shape = 'u32[]', space=smem, size = 0x4, offset = 0x4, fixed_abs, tag = 'smem constant byte address 0x4 - core index']
  #allocation1 [shape = 'u32[72,128]{1,0:T(1,128)}', space=vmem, size = 0x9000, scoped, tag = 'internal scratch']
  %s0 = inlined_call_operand.vmem [shape: f32[2,4,16], index: 0, kind: input, shape index: {}]
  %s1 = inlined_call_operand.hbm [shape: bf16[784,384], index: 1, kind: input, shape index: {}]
  %s2 = inlined_call_operand.hbm [shape: bf16[384,128], index: 2, kind: input, shape index: {}]
  %s3 = inlined_call_operand.hbm [shape: f32[8,384], index: 3, kind: input, shape index: {}]
  %s4 = inlined_call_operand.vmem [shape: f32[2,4,128], index: 4, kind: input, shape index: {}]
  %s5 = inlined_call_operand.vmem [shape: f32[2,3,4,128], index: 5, kind: output, shape index: {}]
  %s6 = sld [smem:[#allocation0]]
  $region65: #{continuous_actor_forward.1} parent=0
    _
  %s8 = ssub.s32 1, %s6
  %s9 = scalar_select 0, %s8, %s6
  $region1: #{continuous_actor_forward.1} parent=0
    #allocation2 [shape = 'u8[602112]{0}', space=vmem, size = 0x93000, scoped, tag = 'input window, operand 1, single buffered']
    #allocation3 [shape = 's32[2]{0}', space=sflag, size = 0x8, scoped, tag = 'scoped memory for continuous_actor_forward.1']
    #allocation4 [shape = 'u8[98304]{0}', space=vmem, size = 0x18000, scoped, tag = 'input window, operand 2, single buffered']
    #allocation5 [shape = 's32[1]{0}', space=sflag, size = 0x4, scoped, tag = 'scoped memory for continuous_actor_forward.1']
    #allocation6 [shape = 'u8[12288]{0}', space=vmem, size = 0x3000, scoped, tag = 'input window, operand 3, single buffered']
    %10 = vsyncpa [#allocation3], 0
    %11 = vsyncpa [#allocation5], 0
    loop: start=0, step=1, limit=4
    $region2: #{continuous_actor_forward.1} parent=1 // loop_pre_header
      _
    $region3: #{continuous_actor_forward.1} parent=1 // loop_header
      %s13 = sphi 0, %s17
      %p14 = scmp.ge.s32.totalorder %s13, 4
      %s23 = sphi 0, %s25
      %s26 = sphi 0, %s23
      %s27 = sphi 0, %s26
      %s43 = sphi 0, %s27
      %s47 = sphi 0, %s47
      %s49 = sphi 0, %s47
      %s50 = sphi 0, %s49
      %s64 = sphi 0, %s50
      %s68 = sphi 0, %s68
      %s70 = sphi 0, %s68
      %s71 = sphi 0, %s70
      %s85 = sphi 0, %s71
      %s89 = sphi 0, %s89
      %s91 = sphi 0, %s89
      %s92 = sphi 0, %s91
      %s106 = sphi 0, %s92
      %s112 = sphi 0, %s114
      %s115 = sphi 0, %s112
      %s116 = sphi 0, %s115
      %s132 = sphi 0, %s116
      %s138 = sphi 0, %s140
      %s141 = sphi 0, %s138
      %s142 = sphi 0, %s141
      %s158 = sphi 0, %s142
    $region4: #{continuous_actor_forward.1} parent=1 // loop_header_branch
      %16 = sbr.rel (%p14) target = $region8
    $region5: #{continuous_actor_forward.1} parent=1 // loop_body
      %s18 = ssub.s32 %s13, 1
      %s19 = ssub.s32 %s13, 2
      %s20 = sadd.s32 %s13, 1
      %s21 = ssub.s32 %s13, %s20
      %p22 = scmp.eq.s32.totalorder %s21, 0
      %s24 = sadd.s32 %s23, 1
      %s25 = scalar_select %p22, %s23, %s24
      %p28 = pneg %p22
      %p29 = scmp.eq.s32.totalorder %s13, 1
      %p30 = por %p28, %p29
      %p31 = scmp.ne.s32.totalorder %s23, %s26
      %p32 = scmp.eq.s32.totalorder %s13, 0
      %p33 = por %p31, %p32
      %p34 = scmp.ne.s32.totalorder %s23, %s26
      %p35 = scmp.eq.s32.totalorder %s18, 1
      %p36 = por %p34, %p35
      %p37 = scmp.ne.s32.totalorder %s26, %s27
      %p38 = scmp.eq.s32.totalorder %s18, 0
      %p39 = por %p37, %p38
      %p40 = scmp.ne.s32.totalorder %s26, %s27
      %p41 = scmp.eq.s32.totalorder %s19, 1
      %p42 = por %p40, %p41
      %p44 = scmp.ne.s32.totalorder %s27, %s43
      %p45 = scmp.eq.s32.totalorder %s19, 0
      %p46 = por %p44, %p45
      %s48 = sadd.s32 %s47, 1
      %p51 = scmp.eq.s32.totalorder %s13, 1
      %p52 = scmp.ne.s32.totalorder %s47, %s49
      %p53 = scmp.eq.s32.totalorder %s13, 0
      %p54 = por %p52, %p53
      %p55 = scmp.ne.s32.totalorder %s47, %s49
      %p56 = scmp.eq.s32.totalorder %s18, 1
      %p57 = por %p55, %p56
      %p58 = scmp.ne.s32.totalorder %s49, %s50
      %p59 = scmp.eq.s32.totalorder %s18, 0
      %p60 = por %p58, %p59
      %p61 = scmp.ne.s32.totalorder %s49, %s50
      %p62 = scmp.eq.s32.totalorder %s19, 1
      %p63 = por %p61, %p62
      %p65 = scmp.ne.s32.totalorder %s50, %s64
      %p66 = scmp.eq.s32.totalorder %s19, 0
      %p67 = por %p65, %p66
      %s69 = sadd.s32 %s68, 1
      %p72 = scmp.eq.s32.totalorder %s13, 1
      %p73 = scmp.ne.s32.totalorder %s68, %s70
      %p74 = scmp.eq.s32.totalorder %s13, 0
      %p75 = por %p73, %p74
      %p76 = scmp.ne.s32.totalorder %s68, %s70
      %p77 = scmp.eq.s32.totalorder %s18, 1
      %p78 = por %p76, %p77
      %p79 = scmp.ne.s32.totalorder %s70, %s71
      %p80 = scmp.eq.s32.totalorder %s18, 0
      %p81 = por %p79, %p80
      %p82 = scmp.ne.s32.totalorder %s70, %s71
      %p83 = scmp.eq.s32.totalorder %s19, 1
      %p84 = por %p82, %p83
      %p86 = scmp.ne.s32.totalorder %s71, %s85
      %p87 = scmp.eq.s32.totalorder %s19, 0
      %p88 = por %p86, %p87
      %s90 = sadd.s32 %s89, 1
      %p93 = scmp.eq.s32.totalorder %s13, 1
      %p94 = scmp.ne.s32.totalorder %s89, %s91
      %p95 = scmp.eq.s32.totalorder %s13, 0
      %p96 = por %p94, %p95
      %p97 = scmp.ne.s32.totalorder %s89, %s91
      %p98 = scmp.eq.s32.totalorder %s18, 1
      %p99 = por %p97, %p98
      %p100 = scmp.ne.s32.totalorder %s91, %s92
      %p101 = scmp.eq.s32.totalorder %s18, 0
      %p102 = por %p100, %p101
      %p103 = scmp.ne.s32.totalorder %s91, %s92
      %p104 = scmp.eq.s32.totalorder %s19, 1
      %p105 = por %p103, %p104
      %p107 = scmp.ne.s32.totalorder %s92, %s106
      %p108 = scmp.eq.s32.totalorder %s19, 0
      %p109 = por %p107, %p108
      %s110 = ssub.s32 %s13, %s20
      %p111 = scmp.eq.s32.totalorder %s110, 0
      %s113 = sadd.s32 %s112, 1
      %s114 = scalar_select %p111, %s112, %s113
      %p117 = pneg %p111
      %p118 = scmp.eq.s32.totalorder %s13, 1
      %p119 = por %p117, %p118
      %p120 = scmp.ne.s32.totalorder %s112, %s115
      %p121 = scmp.eq.s32.totalorder %s13, 0
      %p122 = por %p120, %p121
      %p123 = scmp.ne.s32.totalorder %s112, %s115
      %p124 = scmp.eq.s32.totalorder %s18, 1
      %p125 = por %p123, %p124
      %p126 = scmp.ne.s32.totalorder %s115, %s116
      %p127 = scmp.eq.s32.totalorder %s18, 0
      %p128 = por %p126, %p127
      %p129 = scmp.ne.s32.totalorder %s115, %s116
      %p130 = scmp.eq.s32.totalorder %s19, 1
      %p131 = por %p129, %p130
      %p133 = scmp.ne.s32.totalorder %s116, %s132
      %p134 = scmp.eq.s32.totalorder %s19, 0
      %p135 = por %p133, %p134
      %s136 = ssub.s32 %s13, %s20
      %p137 = scmp.eq.s32.totalorder %s136, 0
      %s139 = sadd.s32 %s138, 1
      %s140 = scalar_select %p137, %s138, %s139
      %p143 = pneg %p137
      %p144 = scmp.eq.s32.totalorder %s13, 1
      %p145 = por %p143, %p144
      %p146 = scmp.ne.s32.totalorder %s138, %s141
      %p147 = scmp.eq.s32.totalorder %s13, 0
      %p148 = por %p146, %p147
      %p149 = scmp.ne.s32.totalorder %s138, %s141
      %p150 = scmp.eq.s32.totalorder %s18, 1
      %p151 = por %p149, %p150
      %p152 = scmp.ne.s32.totalorder %s141, %s142
      %p153 = scmp.eq.s32.totalorder %s18, 0
      %p154 = por %p152, %p153
      %p155 = scmp.ne.s32.totalorder %s141, %s142
      %p156 = scmp.eq.s32.totalorder %s19, 1
      %p157 = por %p155, %p156
      %p159 = scmp.ne.s32.totalorder %s142, %s158
      %p160 = scmp.eq.s32.totalorder %s19, 0
      %p161 = por %p159, %p160
      %p162 = scmp.le.s32.totalorder 1, %s13
      %p163 = scmp.lt.s32.totalorder %s13, 3
      %p164 = pnand %p162, %p163
      %p165 = pneg %p164
      // Predicated region
      $region9: #{continuous_actor_forward.1} parent=5 // pred_check
        _
      $region10: #{continuous_actor_forward.1} parent=5 // pred_check_branch
        %167 = sbr.rel (%p164) target = $region12
      $region11: #{continuous_actor_forward.1} parent=5 // pred_region
        %s168 = ssub.s32 %s13, 1
        // Predicated region
        $region13: #{continuous_actor_forward.1} parent=11 // pred_check
          %p169 = pneg %p60
        $region14: #{continuous_actor_forward.1} parent=11 // pred_check_branch
          %171 = sbr.rel (%p169) target = $region16
        $region15: #{continuous_actor_forward.1} parent=11 // pred_region
          %173 = vsyncadd [#allocation3], 0
          %s174 = sshll.u32 %s1, 4
          %s175 = int_to_ptr.hbm [resolvable:$true] %s174
          %s176 = sshll.u32 [#allocation2], 4
          %s177 = int_to_ptr.vmem [resolvable:$true] %s176
          %182 = dma.hbm_to_vmem [thread:$0]  %s175, 18816, %s177, [#allocation3], 192, 192, 12
        $region16: #{continuous_actor_forward.1} parent=11 // pred_fallthru
          _
        // Predicated region
        $region17: #{continuous_actor_forward.1} parent=11 // pred_check
          %p183 = pneg %p81
        $region18: #{continuous_actor_forward.1} parent=11 // pred_check_branch
          %185 = sbr.rel (%p183) target = $region20
        $region19: #{continuous_actor_forward.1} parent=11 // pred_region
          %187 = vsyncadd [#allocation5], 0
          %s188 = sshll.u32 %s2, 4
          %s189 = int_to_ptr.hbm [resolvable:$true] %s188
          %s190 = sshll.u32 [#allocation4], 4
          %s191 = int_to_ptr.vmem [resolvable:$true] %s190
          %196 = dma.hbm_to_vmem [thread:$0]  %s189, 3072, %s191, [#allocation5], 64, 64, 4
        $region20: #{continuous_actor_forward.1} parent=11 // pred_fallthru
          _
        // Predicated region
        $region21: #{continuous_actor_forward.1} parent=11 // pred_check
          %p197 = pneg %p102
        $region22: #{continuous_actor_forward.1} parent=11 // pred_check_branch
          %199 = sbr.rel (%p197) target = $region24
        $region23: #{continuous_actor_forward.1} parent=11 // pred_region
          %201 = vsyncadd [#allocation5], 0
          %s203 = sshll.u32 %s3, 4
          %s204 = int_to_ptr.hbm [resolvable:$true] %s203
          %s205 = sshll.u32 [#allocation6], 4
          %s206 = int_to_ptr.vmem [resolvable:$true] %s205
          %208 = dma.hbm_to_vmem [thread:$0]  %s204, 384, %s206, [#allocation5]
        $region24: #{continuous_actor_forward.1} parent=11 // pred_fallthru
          _
      $region12: #{continuous_actor_forward.1} parent=5 // pred_fallthru
        _
      %p209 = scmp.lt.s32.totalorder %s13, 2
      // Predicated region
      $region25: #{continuous_actor_forward.1} parent=5 // pred_check
        %p210 = pneg %p209
      $region26: #{continuous_actor_forward.1} parent=5 // pred_check_branch
        %212 = sbr.rel (%p210) target = $region28
      $region27: #{continuous_actor_forward.1} parent=5 // pred_region
        // Predicated region
        $region29: #{continuous_actor_forward.1} parent=27 // pred_check
          %p213 = pneg %p33
        $region30: #{continuous_actor_forward.1} parent=27 // pred_check_branch
          %215 = sbr.rel (%p213) target = $region32
        $region31: #{continuous_actor_forward.1} parent=27 // pred_region
          %p216 = scmp.lt.s32.totalorder %s13, 1
          %s217 = scalar_select %p216, %s13, 1
          %s218 = smul.addr %s217, 4
          %s219 = scalar_lea.vmem %s0, %s218
        $region32: #{continuous_actor_forward.1} parent=27 // pred_fallthru
          _
        // Predicated region
        $region33: #{continuous_actor_forward.1} parent=27 // pred_check
          %p220 = pneg %p122
        $region34: #{continuous_actor_forward.1} parent=27 // pred_check_branch
          %222 = sbr.rel (%p220) target = $region36
        $region35: #{continuous_actor_forward.1} parent=27 // pred_region
          %p223 = scmp.lt.s32.totalorder %s13, 1
          %s224 = scalar_select %p223, %s13, 1
          %s225 = smul.addr %s224, 4
          %s226 = scalar_lea.vmem %s4, %s225
        $region36: #{continuous_actor_forward.1} parent=27 // pred_fallthru
          _
      $region28: #{continuous_actor_forward.1} parent=5 // pred_fallthru
        _
      %p227 = scmp.le.s32.totalorder 1, %s13
      %p228 = scmp.lt.s32.totalorder %s13, 3
      %p229 = pnand %p227, %p228
      %p230 = pneg %p229
      // Predicated region
      $region37: #{continuous_actor_forward.1} parent=5 // pred_check
        _
      $region38: #{continuous_actor_forward.1} parent=5 // pred_check_branch
        %232 = sbr.rel (%p229) target = $region40
      $region39: #{continuous_actor_forward.1} parent=5 // pred_region
        %s233 = ssub.s32 %s13, 1
        // Predicated region
        $region41: #{continuous_actor_forward.1} parent=39 // pred_check
          %p234 = pneg %p60
        $region42: #{continuous_actor_forward.1} parent=39 // pred_check_branch
          %236 = sbr.rel (%p234) target = $region44
        $region43: #{continuous_actor_forward.1} parent=39 // pred_region
          %238 = dma.done [#allocation3], 18816
        $region44: #{continuous_actor_forward.1} parent=39 // pred_fallthru
          _
        // Predicated region
        $region45: #{continuous_actor_forward.1} parent=39 // pred_check
          %p239 = pneg %p81
        $region46: #{continuous_actor_forward.1} parent=39 // pred_check_branch
          %241 = sbr.rel (%p239) target = $region48
        $region47: #{continuous_actor_forward.1} parent=39 // pred_region
          %243 = dma.done [#allocation5], 3072
        $region48: #{continuous_actor_forward.1} parent=39 // pred_fallthru
          _
        // Predicated region
        $region49: #{continuous_actor_forward.1} parent=39 // pred_check
          %p244 = pneg %p102
        $region50: #{continuous_actor_forward.1} parent=39 // pred_check_branch
          %246 = sbr.rel (%p244) target = $region52
        $region51: #{continuous_actor_forward.1} parent=39 // pred_region
          %248 = dma.done [#allocation5], 384
        $region52: #{continuous_actor_forward.1} parent=39 // pred_fallthru
          _
        %p249 = scmp.lt.s32.totalorder %s18, 1
        %s250 = scalar_select %p249, %s18, 1
        %s251 = smul.addr %s250, 4
        %s252 = scalar_lea.vmem %s0, %s251
        %p253 = pneg %p39
        %p254 = pneg %p36
        %p255 = pneg %p60
        %p256 = pneg %p57
        %p257 = pneg %p81
        %p258 = pneg %p78
        %p259 = pneg %p102
        %p260 = pneg %p99
        %p261 = scmp.lt.s32.totalorder %s18, 1
        %s262 = scalar_select %p261, %s18, 1
        %s263 = smul.addr %s262, 4
        %s264 = scalar_lea.vmem %s4, %s263
        %p265 = pneg %p128
        %p266 = pneg %p125
        %p267 = pneg %p154
        %p268 = pneg %p151
        %p269 = scmp.lt.s32.totalorder %s18, 1
        %s270 = scalar_select %p269, %s18, 1
        %s271 = smul.addr %s270, 3
        %s272 = smul.addr %s271, 4
        %s273 = scalar_lea.vmem %s5, %s272
        %p274 = scmp.lt.s32.totalorder %s18, 1
        %s275 = scalar_select %p274, %s18, 1
        %s276 = smul.addr %s275, 4
        %s277 = scalar_lea.vmem %s0, %s276
        %p278 = scmp.lt.s32.totalorder %s18, 1
        %s279 = scalar_select %p278, %s18, 1
        %s280 = smul.addr %s279, 4
        %s281 = scalar_lea.vmem %s4, %s280
        %p282 = scmp.lt.s32.totalorder %s18, 1
        %s283 = scalar_select %p282, %s18, 1
        %s284 = smul.addr %s283, 3
        %s285 = smul.addr %s284, 4
        %s286 = scalar_lea.vmem %s5, %s285
        %v288 = vld [vmem:[#allocation6] sm:$0xff]
        %v289 = vld [vmem:[#allocation6 + $0x8] sm:$0xff]
        %v290 = vld [vmem:[#allocation6 + $0x10] sm:$0xff]
        %v291 = vld [vmem:[#allocation2] sm:$0xff]
        %v292 = vld [vmem:[#allocation2 + $0x8] sm:$0xf]
        %v293 = vld [vmem:[#allocation2 + $0xc] sm:$0xff]
        %v294 = vld [vmem:[#allocation2 + $0x14] sm:$0xf]
        %v295 = vld [vmem:[#allocation2 + $0x18] sm:$0xff]
        %v296 = vld [vmem:[#allocation2 + $0x20] sm:$0xf]
        %v297 = vld [vmem:[#allocation2 + $0x24] sm:$0xff]
        %v298 = vld [vmem:[#allocation2 + $0x2c] sm:$0xf]
        %v299 = vld [vmem:[#allocation2 + $0x30] sm:$0xff]
        %v300 = vld [vmem:[#allocation2 + $0x38] sm:$0xf]
        %v301 = vld [vmem:[#allocation2 + $0x3c] sm:$0xff]
        %v302 = vld [vmem:[#allocation2 + $0x44] sm:$0xf]
        %v303 = vld [vmem:[#allocation2 + $0x48] sm:$0xff]
        %v304 = vld [vmem:[#allocation2 + $0x50] sm:$0xf]
        %v305 = vld [vmem:[#allocation2 + $0x54] sm:$0xff]
        %v306 = vld [vmem:[#allocation2 + $0x5c] sm:$0xf]
        %v307 = vld [vmem:[#allocation2 + $0x60] sm:$0xff]
        %v308 = vld [vmem:[#allocation2 + $0x68] sm:$0xf]
        %v309 = vld [vmem:[#allocation2 + $0x6c] sm:$0xff]
        %v310 = vld [vmem:[#allocation2 + $0x74] sm:$0xf]
        %v311 = vld [vmem:[#allocation2 + $0x78] sm:$0xff]
        %v312 = vld [vmem:[#allocation2 + $0x80] sm:$0xf]
        %v313 = vld [vmem:[#allocation2 + $0x84] sm:$0xff]
        %v314 = vld [vmem:[#allocation2 + $0x8c] sm:$0xf]
        %v315 = vld [vmem:[#allocation2 + $0x90] sm:$0xff]
        %v316 = vld [vmem:[#allocation2 + $0x98] sm:$0xf]
        %v317 = vld [vmem:[#allocation2 + $0x9c] sm:$0xff]
        %v318 = vld [vmem:[#allocation2 + $0xa4] sm:$0xf]
        %v319 = vld [vmem:[#allocation2 + $0xa8] sm:$0xff]
        %v320 = vld [vmem:[#allocation2 + $0xb0] sm:$0xf]
        %v321 = vld [vmem:[#allocation2 + $0xb4] sm:$0xff]
        %v322 = vld [vmem:[#allocation2 + $0xbc] sm:$0xf]
        %v323 = vld [vmem:[#allocation2 + $0xc0] sm:$0xff]
        %v324 = vld [vmem:[#allocation2 + $0xc8] sm:$0xf]
        %v325 = vld [vmem:[#allocation2 + $0xcc] sm:$0xff]
        %v326 = vld [vmem:[#allocation2 + $0xd4] sm:$0xf]
        %v327 = vld [vmem:[#allocation2 + $0xd8] sm:$0xff]
        %v328 = vld [vmem:[#allocation2 + $0xe0] sm:$0xf]
        %v329 = vld [vmem:[#allocation2 + $0xe4] sm:$0xff]
        %v330 = vld [vmem:[#allocation2 + $0xec] sm:$0xf]
        %v331 = vld [vmem:[#allocation2 + $0xf0] sm:$0xff]
        %v332 = vld [vmem:[#allocation2 + $0xf8] sm:$0xf]
        %v333 = vld [vmem:[#allocation2 + $0xfc] sm:$0xff]
        %v334 = vld [vmem:[#allocation2 + $0x104] sm:$0xf]
        %v335 = vld [vmem:[#allocation2 + $0x108] sm:$0xff]
        %v336 = vld [vmem:[#allocation2 + $0x110] sm:$0xf]
        %v337 = vld [vmem:[#allocation2 + $0x114] sm:$0xff]
        %v338 = vld [vmem:[#allocation2 + $0x11c] sm:$0xf]
        %v339 = vld [vmem:[#allocation2 + $0x120] sm:$0xff]
        %v340 = vld [vmem:[#allocation2 + $0x128] sm:$0xf]
        %v341 = vld [vmem:[#allocation2 + $0x12c] sm:$0xff]
        %v342 = vld [vmem:[#allocation2 + $0x134] sm:$0xf]
        %v343 = vld [vmem:[#allocation2 + $0x138] sm:$0xff]
        %v344 = vld [vmem:[#allocation2 + $0x140] sm:$0xf]
        %v345 = vld [vmem:[#allocation2 + $0x144] sm:$0xff]
        %v346 = vld [vmem:[#allocation2 + $0x14c] sm:$0xf]
        %v347 = vld [vmem:[#allocation2 + $0x150] sm:$0xff]
        %v348 = vld [vmem:[#allocation2 + $0x158] sm:$0xf]
        %v349 = vld [vmem:[#allocation2 + $0x15c] sm:$0xff]
        %v350 = vld [vmem:[#allocation2 + $0x164] sm:$0xf]
        %v351 = vld [vmem:[#allocation2 + $0x168] sm:$0xff]
        %v352 = vld [vmem:[#allocation2 + $0x170] sm:$0xf]
        %v353 = vld [vmem:[#allocation2 + $0x174] sm:$0xff]
        %v354 = vld [vmem:[#allocation2 + $0x17c] sm:$0xf]
        %v355 = vld [vmem:[#allocation2 + $0x180] sm:$0xff]
        %v356 = vld [vmem:[#allocation2 + $0x188] sm:$0xf]
        %v357 = vld [vmem:[#allocation2 + $0x18c] sm:$0xff]
        %v358 = vld [vmem:[#allocation2 + $0x194] sm:$0xf]
        %v359 = vld [vmem:[#allocation2 + $0x198] sm:$0xff]
        %v360 = vld [vmem:[#allocation2 + $0x1a0] sm:$0xf]
        %v361 = vld [vmem:[#allocation2 + $0x1a4] sm:$0xff]
        %v362 = vld [vmem:[#allocation2 + $0x1ac] sm:$0xf]
        %v363 = vld [vmem:[#allocation2 + $0x1b0] sm:$0xff]
        %v364 = vld [vmem:[#allocation2 + $0x1b8] sm:$0xf]
        %v365 = vld [vmem:[#allocation2 + $0x1bc] sm:$0xff]
        %v366 = vld [vmem:[#allocation2 + $0x1c4] sm:$0xf]
        %v367 = vld [vmem:[#allocation2 + $0x1c8] sm:$0xff]
        %v368 = vld [vmem:[#allocation2 + $0x1d0] sm:$0xf]
        %v369 = vld [vmem:[#allocation2 + $0x1d4] sm:$0xff]
        %v370 = vld [vmem:[#allocation2 + $0x1dc] sm:$0xf]
        %v371 = vld [vmem:[#allocation2 + $0x1e0] sm:$0xff]
        %v372 = vld [vmem:[#allocation2 + $0x1e8] sm:$0xf]
        %v373 = vld [vmem:[#allocation2 + $0x1ec] sm:$0xff]
        %v374 = vld [vmem:[#allocation2 + $0x1f4] sm:$0xf]
        %v375 = vld [vmem:[#allocation2 + $0x1f8] sm:$0xff]
        %v376 = vld [vmem:[#allocation2 + $0x200] sm:$0xf]
        %v377 = vld [vmem:[#allocation2 + $0x204] sm:$0xff]
        %v378 = vld [vmem:[#allocation2 + $0x20c] sm:$0xf]
        %v379 = vld [vmem:[#allocation2 + $0x210] sm:$0xff]
        %v380 = vld [vmem:[#allocation2 + $0x218] sm:$0xf]
        %v381 = vld [vmem:[#allocation2 + $0x21c] sm:$0xff]
        %v382 = vld [vmem:[#allocation2 + $0x224] sm:$0xf]
        %v383 = vld [vmem:[#allocation2 + $0x228] sm:$0xff]
        %v384 = vld [vmem:[#allocation2 + $0x230] sm:$0xf]
        %v385 = vld [vmem:[#allocation2 + $0x234] sm:$0xff]
        %v386 = vld [vmem:[#allocation2 + $0x23c] sm:$0xf]
        %v387 = vld [vmem:[#allocation2 + $0x240] sm:$0xff]
        %v388 = vld [vmem:[#allocation2 + $0x248] sm:$0xf]
        %v389 = vld [vmem:[#allocation2 + $0x24c] sm:$0xff]
        %v390 = vld [vmem:[#allocation2 + $0x254] sm:$0xf]
        %v391 = vld [vmem:[#allocation2 + $0x258] sm:$0xff]
        %v392 = vld [vmem:[#allocation2 + $0x260] sm:$0xf]
        %v393 = vld [vmem:[#allocation2 + $0x264] sm:$0xff]
        %v394 = vld [vmem:[#allocation2 + $0x26c] sm:$0xf]
        %v395 = vld [vmem:[#allocation2 + $0x270] sm:$0xff]
        %v396 = vld [vmem:[#allocation2 + $0x278] sm:$0xf]
        %v397 = vld [vmem:[#allocation2 + $0x27c] sm:$0xff]
        %v398 = vld [vmem:[#allocation2 + $0x284] sm:$0xf]
        %v399 = vld [vmem:[#allocation2 + $0x288] sm:$0xff]
        %v400 = vld [vmem:[#allocation2 + $0x290] sm:$0xf]
        %v401 = vld [vmem:[#allocation2 + $0x294] sm:$0xff]
        %v402 = vld [vmem:[#allocation2 + $0x29c] sm:$0xf]
        %v403 = vld [vmem:[#allocation2 + $0x2a0] sm:$0xff]
        %v404 = vld [vmem:[#allocation2 + $0x2a8] sm:$0xf]
        %v405 = vld [vmem:[#allocation2 + $0x2ac] sm:$0xff]
        %v406 = vld [vmem:[#allocation2 + $0x2b4] sm:$0xf]
        %v407 = vld [vmem:[#allocation2 + $0x2b8] sm:$0xff]
        %v408 = vld [vmem:[#allocation2 + $0x2c0] sm:$0xf]
        %v409 = vld [vmem:[#allocation2 + $0x2c4] sm:$0xff]
        %v410 = vld [vmem:[#allocation2 + $0x2cc] sm:$0xf]
        %v411 = vld [vmem:[#allocation2 + $0x2d0] sm:$0xff]
        %v412 = vld [vmem:[#allocation2 + $0x2d8] sm:$0xf]
        %v413 = vld [vmem:[#allocation2 + $0x2dc] sm:$0xff]
        %v414 = vld [vmem:[#allocation2 + $0x2e4] sm:$0xf]
        %v415 = vld [vmem:[#allocation2 + $0x2e8] sm:$0xff]
        %v416 = vld [vmem:[#allocation2 + $0x2f0] sm:$0xf]
        %v417 = vld [vmem:[#allocation2 + $0x2f4] sm:$0xff]
        %v418 = vld [vmem:[#allocation2 + $0x2fc] sm:$0xf]
        %v419 = vld [vmem:[#allocation2 + $0x300] sm:$0xff]
        %v420 = vld [vmem:[#allocation2 + $0x308] sm:$0xf]
        %v421 = vld [vmem:[#allocation2 + $0x30c] sm:$0xff]
        %v422 = vld [vmem:[#allocation2 + $0x314] sm:$0xf]
        %v423 = vld [vmem:[#allocation2 + $0x318] sm:$0xff]
        %v424 = vld [vmem:[#allocation2 + $0x320] sm:$0xf]
        %v425 = vld [vmem:[#allocation2 + $0x324] sm:$0xff]
        %v426 = vld [vmem:[#allocation2 + $0x32c] sm:$0xf]
        %v427 = vld [vmem:[#allocation2 + $0x330] sm:$0xff]
        %v428 = vld [vmem:[#allocation2 + $0x338] sm:$0xf]
        %v429 = vld [vmem:[#allocation2 + $0x33c] sm:$0xff]
        %v430 = vld [vmem:[#allocation2 + $0x344] sm:$0xf]
        %v431 = vld [vmem:[#allocation2 + $0x348] sm:$0xff]
        %v432 = vld [vmem:[#allocation2 + $0x350] sm:$0xf]
        %v433 = vld [vmem:[#allocation2 + $0x354] sm:$0xff]
        %v434 = vld [vmem:[#allocation2 + $0x35c] sm:$0xf]
        %v435 = vld [vmem:[#allocation2 + $0x360] sm:$0xff]
        %v436 = vld [vmem:[#allocation2 + $0x368] sm:$0xf]
        %v437 = vld [vmem:[#allocation2 + $0x36c] sm:$0xff]
        %v438 = vld [vmem:[#allocation2 + $0x374] sm:$0xf]
        %v439 = vld [vmem:[#allocation2 + $0x378] sm:$0xff]
        %v440 = vld [vmem:[#allocation2 + $0x380] sm:$0xf]
        %v441 = vld [vmem:[#allocation2 + $0x384] sm:$0xff]
        %v442 = vld [vmem:[#allocation2 + $0x38c] sm:$0xf]
        %v443 = vld [vmem:[#allocation2 + $0x390] sm:$0xff]
        %v444 = vld [vmem:[#allocation2 + $0x398] sm:$0xf]
        %v445 = vld [vmem:[#allocation2 + $0x39c] sm:$0xff]
        %v446 = vld [vmem:[#allocation2 + $0x3a4] sm:$0xf]
        %v447 = vld [vmem:[#allocation2 + $0x3a8] sm:$0xff]
        %v448 = vld [vmem:[#allocation2 + $0x3b0] sm:$0xf]
        %v449 = vld [vmem:[#allocation2 + $0x3b4] sm:$0xff]
        %v450 = vld [vmem:[#allocation2 + $0x3bc] sm:$0xf]
        %v451 = vld [vmem:[#allocation2 + $0x3c0] sm:$0xff]
        %v452 = vld [vmem:[#allocation2 + $0x3c8] sm:$0xf]
        %v453 = vld [vmem:[#allocation2 + $0x3cc] sm:$0xff]
        %v454 = vld [vmem:[#allocation2 + $0x3d4] sm:$0xf]
        %v455 = vld [vmem:[#allocation2 + $0x3d8] sm:$0xff]
        %v456 = vld [vmem:[#allocation2 + $0x3e0] sm:$0xf]
        %v457 = vld [vmem:[#allocation2 + $0x3e4] sm:$0xff]
        %v458 = vld [vmem:[#allocation2 + $0x3ec] sm:$0xf]
        %v459 = vld [vmem:[#allocation2 + $0x3f0] sm:$0xff]
        %v460 = vld [vmem:[#allocation2 + $0x3f8] sm:$0xf]
        %v461 = vld [vmem:[#allocation2 + $0x3fc] sm:$0xff]
        %v462 = vld [vmem:[#allocation2 + $0x404] sm:$0xf]
        %v463 = vld [vmem:[#allocation2 + $0x408] sm:$0xff]
        %v464 = vld [vmem:[#allocation2 + $0x410] sm:$0xf]
        %v465 = vld [vmem:[#allocation2 + $0x414] sm:$0xff]
        %v466 = vld [vmem:[#allocation2 + $0x41c] sm:$0xf]
        %v467 = vld [vmem:[#allocation2 + $0x420] sm:$0xff]
        %v468 = vld [vmem:[#allocation2 + $0x428] sm:$0xf]
        %v469 = vld [vmem:[#allocation2 + $0x42c] sm:$0xff]
        %v470 = vld [vmem:[#allocation2 + $0x434] sm:$0xf]
        %v471 = vld [vmem:[#allocation2 + $0x438] sm:$0xff]
        %v472 = vld [vmem:[#allocation2 + $0x440] sm:$0xf]
        %v473 = vld [vmem:[#allocation2 + $0x444] sm:$0xff]
        %v474 = vld [vmem:[#allocation2 + $0x44c] sm:$0xf]
        %v475 = vld [vmem:[#allocation2 + $0x450] sm:$0xff]
        %v476 = vld [vmem:[#allocation2 + $0x458] sm:$0xf]
        %v477 = vld [vmem:[#allocation2 + $0x45c] sm:$0xff]
        %v478 = vld [vmem:[#allocation2 + $0x464] sm:$0xf]
        %v479 = vld [vmem:[#allocation2 + $0x468] sm:$0xff]
        %v480 = vld [vmem:[#allocation2 + $0x470] sm:$0xf]
        %v481 = vld [vmem:[#allocation2 + $0x474] sm:$0xff]
        %v482 = vld [vmem:[#allocation2 + $0x47c] sm:$0xf]
        %v483 = vld [vmem:[#allocation2 + $0x480] sm:$0xff]
        %v484 = vld [vmem:[#allocation2 + $0x488] sm:$0xf]
        %v485 = vld [vmem:[#allocation2 + $0x48c] sm:$0xff]
        %v486 = vld [vmem:[#allocation2 + $0x494] sm:$0xf]
        %v487 = vld [vmem:[%s277] sm:$0xf]
        %v488 = vpack.c.bf16 %v487, %v487
        %v493 = vunpack.c.l.b16 %v291
        %v494 = vunpack.c.h.b16 %v291
        %v495 = vunpack.c.l.b16 %v292
        %v496 = vunpack.c.l.b16 %v293
        %v497 = vunpack.c.h.b16 %v293
        %v498 = vunpack.c.l.b16 %v294
        %v499 = vpack.c.b16 %v496, %v493
        %v500 = vpack.c.b16 %v497, %v494
        %v501 = vpack.c.b16 %v498, %v495
        %vm505 = vcmask 130048
        %v507 = vsel %vm505, %v488, 0
        %509 = vmatpush.bf16.msra.mxu0 0
        %510 = vmatpush.bf16.msra.mxu0 0
        %511 = vmatpush.bf16.msra.mxu0 0
        %512 = vmatpush.bf16.msra.mxu0 0
        %513 = vmatpush.bf16.msra.mxu0 0
        %514 = vmatpush.bf16.msra.mxu0 0
        %515 = vmatpush.bf16.msra.mxu0 0
        %516 = vmatpush.bf16.msra.mxu0 %v499
        %517 = vmatmul.bf16.gmra.mxu0 %v507
        %v518 = vpop.f32.mrf.mxu0
        %v519 = vadd.f32 0.0, %v518
        %v520 = vpop.f32.mrf.mxu0
        %521 = vdwg.mxu0
        %522 = vmatpush.bf16.msra.mxu0 0
        %523 = vmatpush.bf16.msra.mxu0 0
        %524 = vmatpush.bf16.msra.mxu0 0
        %525 = vmatpush.bf16.msra.mxu0 0
        %526 = vmatpush.bf16.msra.mxu0 0
        %527 = vmatpush.bf16.msra.mxu0 0
        %528 = vmatpush.bf16.msra.mxu0 0
        %529 = vmatpush.bf16.msra.mxu0 %v500
        %530 = vmatmul.bf16.gmra.mxu0 %v507
        %v531 = vpop.f32.mrf.mxu0
        %v532 = vadd.f32 0.0, %v531
        %v533 = vpop.f32.mrf.mxu0
        %534 = vdwg.mxu0
        %535 = vmatpush.bf16.msra.mxu0 0
        %536 = vmatpush.bf16.msra.mxu0 0
        %537 = vmatpush.bf16.msra.mxu0 0
        %538 = vmatpush.bf16.msra.mxu0 0
        %539 = vmatpush.bf16.msra.mxu0 0
        %540 = vmatpush.bf16.msra.mxu0 0
        %541 = vmatpush.bf16.msra.mxu0 0
        %542 = vmatpush.bf16.msra.mxu0 %v501
        %543 = vmatmul.bf16.gmra.mxu0 %v507
        %v544 = vpop.f32.mrf.mxu0
        %v545 = vadd.f32 0.0, %v544
        %v546 = vpop.f32.mrf.mxu0
        %547 = vdwg.mxu0
        %vm548 = vcmask 1043456
        %v549 = vsel %vm548, %v519, 0.0
        %v550 = vrot.slane %v549, 4
        %v551 = vadd.f32 %v549, %v550
        %v552 = vrot.slane %v551, 2
        %v553 = vadd.f32 %v551, %v552
        %v554 = vrot.slane %v553, 1
        %v555 = vadd.f32 %v553, %v554
        %v556 = vsel %vm548, %v532, 0.0
        %v557 = vrot.slane %v556, 4
        %v558 = vadd.f32 %v556, %v557
        %v559 = vrot.slane %v558, 2
        %v560 = vadd.f32 %v558, %v559
        %v561 = vrot.slane %v560, 1
        %v562 = vadd.f32 %v560, %v561
        %v563 = vsel %vm548, %v545, 0.0
        %v564 = vrot.slane %v563, 4
        %v565 = vadd.f32 %v563, %v564
        %v566 = vrot.slane %v565, 2
        %v567 = vadd.f32 %v565, %v566
        %v568 = vrot.slane %v567, 1
        %v569 = vadd.f32 %v567, %v568
        %v570 = vmul.f32 %v555, 0.25
        %v571 = vmul.f32 %v562, 0.25
        %v572 = vmul.f32 %v569, 0.25
        %v573 = vsub.f32 %v519, %v570
        %v574 = vsub.f32 %v532, %v571
        %v575 = vsub.f32 %v545, %v572
        %v576 = vmul.f32 %v573, %v573
        %v577 = vmul.f32 %v574, %v574
        %v578 = vmul.f32 %v575, %v575
        %v579 = vsel %vm548, %v576, 0.0
        %v580 = vrot.slane %v579, 4
        %v581 = vadd.f32 %v579, %v580
        %v582 = vrot.slane %v581, 2
        %v583 = vadd.f32 %v581, %v582
        %v584 = vrot.slane %v583, 1
        %v585 = vadd.f32 %v583, %v584
        %v586 = vsel %vm548, %v577, 0.0
        %v587 = vrot.slane %v586, 4
        %v588 = vadd.f32 %v586, %v587
        %v589 = vrot.slane %v588, 2
        %v590 = vadd.f32 %v588, %v589
        %v591 = vrot.slane %v590, 1
        %v592 = vadd.f32 %v590, %v591
        %v593 = vsel %vm548, %v578, 0.0
        %v594 = vrot.slane %v593, 4
        %v595 = vadd.f32 %v593, %v594
        %v596 = vrot.slane %v595, 2
        %v597 = vadd.f32 %v595, %v596
        %v598 = vrot.slane %v597, 1
        %v599 = vadd.f32 %v597, %v598
        %v600 = vmul.f32 %v585, 0.25
        %v601 = vmul.f32 %v592, 0.25
        %v602 = vmul.f32 %v599, 0.25
        %v603 = vadd.f32 %v600, 1e-05
        %v604 = vadd.f32 %v601, 1e-05
        %v605 = vadd.f32 %v602, 1e-05
        %v606 = vrsqrt.pop %v603
        %v607 = vmul.f32 %v606, %v603
        %v608 = vmul.f32 %v607, %v606
        %v609 = vmul.f32 0.5, %v608
        %v610 = vsub.f32 1.5, %v609
        %v611 = vmul.f32 %v606, %v610
        %vm612 = vweird.f32 %v603
        %vm613 = vweird.f32 %v606
        %vm614 = vmor %vm612, %vm613
        %v615 = vsel %vm614, %v606, %v611
        %v616 = vrsqrt.pop %v604
        %v617 = vmul.f32 %v616, %v604
        %v618 = vmul.f32 %v617, %v616
        %v619 = vmul.f32 0.5, %v618
        %v620 = vsub.f32 1.5, %v619
        %v621 = vmul.f32 %v616, %v620
        %vm622 = vweird.f32 %v604
        %vm623 = vweird.f32 %v616
        %vm624 = vmor %vm622, %vm623
        %v625 = vsel %vm624, %v616, %v621
        %v626 = vrsqrt.pop %v605
        %v627 = vmul.f32 %v626, %v605
        %v628 = vmul.f32 %v627, %v626
        %v629 = vmul.f32 0.5, %v628
        %v630 = vsub.f32 1.5, %v629
        %v631 = vmul.f32 %v626, %v630
        %vm632 = vweird.f32 %v605
        %vm633 = vweird.f32 %v626
        %vm634 = vmor %vm632, %vm633
        %v635 = vsel %vm634, %v626, %v631
        %v636 = vmul.f32 %v615, %v288
        %v637 = vmul.f32 %v625, %v289
        %v638 = vmul.f32 %v635, %v290
        %v639 = vperm.slane %v636, 0
        %v640 = vperm.slane %v637, 0
        %v641 = vperm.slane %v638, 0
        %v642 = vmul.f32 %v573, %v639
        %v643 = vmul.f32 %v574, %v640
        %v644 = vmul.f32 %v575, %v641
        %v645 = vperm.slane %v288, 1
        %v646 = vperm.slane %v289, 1
        %v647 = vperm.slane %v290, 1
        %v648 = vadd.f32 %v642, %v645
        %v649 = vadd.f32 %v643, %v646
        %v650 = vadd.f32 %v644, %v647
        %v651 = vmax.f32 %v648, 0.0
        %v652 = vmax.f32 %v649, 0.0
        %v653 = vmax.f32 %v650, 0.0
        %v654 = vpack.c.bf16 %v651, %v651
        %v655 = vpack.c.bf16 %v652, %v652
        %v656 = vpack.c.bf16 %v653, %v653
        %v753 = vunpack.c.l.b16 %v295
        %v754 = vunpack.c.h.b16 %v295
        %v755 = vunpack.c.l.b16 %v296
        %v756 = vunpack.c.l.b16 %v297
        %v757 = vunpack.c.h.b16 %v297
        %v758 = vunpack.c.l.b16 %v298
        %v759 = vunpack.c.l.b16 %v299
        %v760 = vunpack.c.h.b16 %v299
        %v761 = vunpack.c.l.b16 %v300
        %v762 = vunpack.c.l.b16 %v301
        %v763 = vunpack.c.h.b16 %v301
        %v764 = vunpack.c.l.b16 %v302
        %v765 = vunpack.c.l.b16 %v303
        %v766 = vunpack.c.h.b16 %v303
        %v767 = vunpack.c.l.b16 %v304
        %v768 = vunpack.c.l.b16 %v305
        %v769 = vunpack.c.h.b16 %v305
        %v770 = vunpack.c.l.b16 %v306
        %v771 = vunpack.c.l.b16 %v307
        %v772 = vunpack.c.h.b16 %v307
        %v773 = vunpack.c.l.b16 %v308
        %v774 = vunpack.c.l.b16 %v309
        %v775 = vunpack.c.h.b16 %v309
        %v776 = vunpack.c.l.b16 %v310
        %v777 = vunpack.c.l.b16 %v311
        %v778 = vunpack.c.h.b16 %v311
        %v779 = vunpack.c.l.b16 %v312
        %v780 = vunpack.c.l.b16 %v313
        %v781 = vunpack.c.h.b16 %v313
        %v782 = vunpack.c.l.b16 %v314
        %v783 = vunpack.c.l.b16 %v315
        %v784 = vunpack.c.h.b16 %v315
        %v785 = vunpack.c.l.b16 %v316
        %v786 = vunpack.c.l.b16 %v317
        %v787 = vunpack.c.h.b16 %v317
        %v788 = vunpack.c.l.b16 %v318
        %v789 = vunpack.c.l.b16 %v319
        %v790 = vunpack.c.h.b16 %v319
        %v791 = vunpack.c.l.b16 %v320
        %v792 = vunpack.c.l.b16 %v321
        %v793 = vunpack.c.h.b16 %v321
        %v794 = vunpack.c.l.b16 %v322
        %v795 = vunpack.c.l.b16 %v323
        %v796 = vunpack.c.h.b16 %v323
        %v797 = vunpack.c.l.b16 %v324
        %v798 = vunpack.c.l.b16 %v325
        %v799 = vunpack.c.h.b16 %v325
        %v800 = vunpack.c.l.b16 %v326
        %v801 = vunpack.c.l.b16 %v327
        %v802 = vunpack.c.h.b16 %v327
        %v803 = vunpack.c.l.b16 %v328
        %v804 = vunpack.c.l.b16 %v329
        %v805 = vunpack.c.h.b16 %v329
        %v806 = vunpack.c.l.b16 %v330
        %v807 = vunpack.c.l.b16 %v331
        %v808 = vunpack.c.h.b16 %v331
        %v809 = vunpack.c.l.b16 %v332
        %v810 = vunpack.c.l.b16 %v333
        %v811 = vunpack.c.h.b16 %v333
        %v812 = vunpack.c.l.b16 %v334
        %v813 = vunpack.c.l.b16 %v335
        %v814 = vunpack.c.h.b16 %v335
        %v815 = vunpack.c.l.b16 %v336
        %v816 = vunpack.c.l.b16 %v337
        %v817 = vunpack.c.h.b16 %v337
        %v818 = vunpack.c.l.b16 %v338
        %v819 = vunpack.c.l.b16 %v339
        %v820 = vunpack.c.h.b16 %v339
        %v821 = vunpack.c.l.b16 %v340
        %v822 = vunpack.c.l.b16 %v341
        %v823 = vunpack.c.h.b16 %v341
        %v824 = vunpack.c.l.b16 %v342
        %v825 = vunpack.c.l.b16 %v343
        %v826 = vunpack.c.h.b16 %v343
        %v827 = vunpack.c.l.b16 %v344
        %v828 = vunpack.c.l.b16 %v345
        %v829 = vunpack.c.h.b16 %v345
        %v830 = vunpack.c.l.b16 %v346
        %v831 = vunpack.c.l.b16 %v347
        %v832 = vunpack.c.h.b16 %v347
        %v833 = vunpack.c.l.b16 %v348
        %v834 = vunpack.c.l.b16 %v349
        %v835 = vunpack.c.h.b16 %v349
        %v836 = vunpack.c.l.b16 %v350
        %v837 = vunpack.c.l.b16 %v351
        %v838 = vunpack.c.h.b16 %v351
        %v839 = vunpack.c.l.b16 %v352
        %v840 = vunpack.c.l.b16 %v353
        %v841 = vunpack.c.h.b16 %v353
        %v842 = vunpack.c.l.b16 %v354
        %v843 = vunpack.c.l.b16 %v355
        %v844 = vunpack.c.h.b16 %v355
        %v845 = vunpack.c.l.b16 %v356
        %v846 = vunpack.c.l.b16 %v357
        %v847 = vunpack.c.h.b16 %v357
        %v848 = vunpack.c.l.b16 %v358
        %v849 = vunpack.c.l.b16 %v359
        %v850 = vunpack.c.h.b16 %v359
        %v851 = vunpack.c.l.b16 %v360
        %v852 = vunpack.c.l.b16 %v361
        %v853 = vunpack.c.h.b16 %v361
        %v854 = vunpack.c.l.b16 %v362
        %v855 = vunpack.c.l.b16 %v363
        %v856 = vunpack.c.h.b16 %v363
        %v857 = vunpack.c.l.b16 %v364
        %v858 = vunpack.c.l.b16 %v365
        %v859 = vunpack.c.h.b16 %v365
        %v860 = vunpack.c.l.b16 %v366
        %v861 = vunpack.c.l.b16 %v367
        %v862 = vunpack.c.h.b16 %v367
        %v863 = vunpack.c.l.b16 %v368
        %v864 = vunpack.c.l.b16 %v369
        %v865 = vunpack.c.h.b16 %v369
        %v866 = vunpack.c.l.b16 %v370
        %v867 = vunpack.c.l.b16 %v371
        %v868 = vunpack.c.h.b16 %v371
        %v869 = vunpack.c.l.b16 %v372
        %v870 = vunpack.c.l.b16 %v373
        %v871 = vunpack.c.h.b16 %v373
        %v872 = vunpack.c.l.b16 %v374
        %v873 = vunpack.c.l.b16 %v375
        %v874 = vunpack.c.h.b16 %v375
        %v875 = vunpack.c.l.b16 %v376
        %v876 = vunpack.c.l.b16 %v377
        %v877 = vunpack.c.h.b16 %v377
        %v878 = vunpack.c.l.b16 %v378
        %v879 = vunpack.c.l.b16 %v379
        %v880 = vunpack.c.h.b16 %v379
        %v881 = vunpack.c.l.b16 %v380
        %v882 = vunpack.c.l.b16 %v381
        %v883 = vunpack.c.h.b16 %v381
        %v884 = vunpack.c.l.b16 %v382
        %v885 = vunpack.c.l.b16 %v383
        %v886 = vunpack.c.h.b16 %v383
        %v887 = vunpack.c.l.b16 %v384
        %v888 = vunpack.c.l.b16 %v385
        %v889 = vunpack.c.h.b16 %v385
        %v890 = vunpack.c.l.b16 %v386
        %v891 = vunpack.c.l.b16 %v387
        %v892 = vunpack.c.h.b16 %v387
        %v893 = vunpack.c.l.b16 %v388
        %v894 = vunpack.c.l.b16 %v389
        %v895 = vunpack.c.h.b16 %v389
        %v896 = vunpack.c.l.b16 %v390
        %v897 = vpack.c.b16 %v756, %v753
        %v898 = vpack.c.b16 %v757, %v754
        %v899 = vpack.c.b16 %v758, %v755
        %v900 = vpack.c.b16 %v762, %v759
        %v901 = vpack.c.b16 %v763, %v760
        %v902 = vpack.c.b16 %v764, %v761
        %v903 = vpack.c.b16 %v768, %v765
        %v904 = vpack.c.b16 %v769, %v766
        %v905 = vpack.c.b16 %v770, %v767
        %v906 = vpack.c.b16 %v774, %v771
        %v907 = vpack.c.b16 %v775, %v772
        %v908 = vpack.c.b16 %v776, %v773
        %v909 = vpack.c.b16 %v780, %v777
        %v910 = vpack.c.b16 %v781, %v778
        %v911 = vpack.c.b16 %v782, %v779
        %v912 = vpack.c.b16 %v786, %v783
        %v913 = vpack.c.b16 %v787, %v784
        %v914 = vpack.c.b16 %v788, %v785
        %v915 = vpack.c.b16 %v792, %v789
        %v916 = vpack.c.b16 %v793, %v790
        %v917 = vpack.c.b16 %v794, %v791
        %v918 = vpack.c.b16 %v798, %v795
        %v919 = vpack.c.b16 %v799, %v796
        %v920 = vpack.c.b16 %v800, %v797
        %v921 = vpack.c.b16 %v804, %v801
        %v922 = vpack.c.b16 %v805, %v802
        %v923 = vpack.c.b16 %v806, %v803
        %v924 = vpack.c.b16 %v810, %v807
        %v925 = vpack.c.b16 %v811, %v808
        %v926 = vpack.c.b16 %v812, %v809
        %v927 = vpack.c.b16 %v816, %v813
        %v928 = vpack.c.b16 %v817, %v814
        %v929 = vpack.c.b16 %v818, %v815
        %v930 = vpack.c.b16 %v822, %v819
        %v931 = vpack.c.b16 %v823, %v820
        %v932 = vpack.c.b16 %v824, %v821
        %v933 = vpack.c.b16 %v828, %v825
        %v934 = vpack.c.b16 %v829, %v826
        %v935 = vpack.c.b16 %v830, %v827
        %v936 = vpack.c.b16 %v834, %v831
        %v937 = vpack.c.b16 %v835, %v832
        %v938 = vpack.c.b16 %v836, %v833
        %v939 = vpack.c.b16 %v840, %v837
        %v940 = vpack.c.b16 %v841, %v838
        %v941 = vpack.c.b16 %v842, %v839
        %v942 = vpack.c.b16 %v846, %v843
        %v943 = vpack.c.b16 %v847, %v844
        %v944 = vpack.c.b16 %v848, %v845
        %v945 = vpack.c.b16 %v852, %v849
        %v946 = vpack.c.b16 %v853, %v850
        %v947 = vpack.c.b16 %v854, %v851
        %v948 = vpack.c.b16 %v858, %v855
        %v949 = vpack.c.b16 %v859, %v856
        %v950 = vpack.c.b16 %v860, %v857
        %v951 = vpack.c.b16 %v864, %v861
        %v952 = vpack.c.b16 %v865, %v862
        %v953 = vpack.c.b16 %v866, %v863
        %v954 = vpack.c.b16 %v870, %v867
        %v955 = vpack.c.b16 %v871, %v868
        %v956 = vpack.c.b16 %v872, %v869
        %v957 = vpack.c.b16 %v876, %v873
        %v958 = vpack.c.b16 %v877, %v874
        %v959 = vpack.c.b16 %v878, %v875
        %v960 = vpack.c.b16 %v882, %v879
        %v961 = vpack.c.b16 %v883, %v880
        %v962 = vpack.c.b16 %v884, %v881
        %v963 = vpack.c.b16 %v888, %v885
        %v964 = vpack.c.b16 %v889, %v886
        %v965 = vpack.c.b16 %v890, %v887
        %v966 = vpack.c.b16 %v894, %v891
        %v967 = vpack.c.b16 %v895, %v892
        %v968 = vpack.c.b16 %v896, %v893
        %1041 = vmatpush.bf16.msra.mxu0 %v918
        %1042 = vmatpush.bf16.msra.mxu0 %v915
        %1043 = vmatpush.bf16.msra.mxu0 %v912
        %1044 = vmatpush.bf16.msra.mxu0 %v909
        %1045 = vmatpush.bf16.msra.mxu0 %v906
        %1046 = vmatpush.bf16.msra.mxu0 %v903
        %1047 = vmatpush.bf16.msra.mxu0 %v900
        %1048 = vmatpush.bf16.msra.mxu0 %v897
        %1049 = vmatmul.bf16.gmra.mxu0 %v654
        %v1050 = vpop.f32.mrf.mxu0
        %v1051 = vadd.f32 0.0, %v1050
        %v1052 = vpop.f32.mrf.mxu0
        %1053 = vdwg.mxu0
        %1054 = vmatpush.bf16.msra.mxu0 %v942
        %1055 = vmatpush.bf16.msra.mxu0 %v939
        %1056 = vmatpush.bf16.msra.mxu0 %v936
        %1057 = vmatpush.bf16.msra.mxu0 %v933
        %1058 = vmatpush.bf16.msra.mxu0 %v930
        %1059 = vmatpush.bf16.msra.mxu0 %v927
        %1060 = vmatpush.bf16.msra.mxu0 %v924
        %1061 = vmatpush.bf16.msra.mxu0 %v921
        %1062 = vmatmul.bf16.gmra.mxu0 %v655
        %v1063 = vpop.f32.mrf.mxu0
        %v1064 = vadd.f32 %v1051, %v1063
        %v1065 = vpop.f32.mrf.mxu0
        %1066 = vdwg.mxu0
        %1067 = vmatpush.bf16.msra.mxu0 %v966
        %1068 = vmatpush.bf16.msra.mxu0 %v963
        %1069 = vmatpush.bf16.msra.mxu0 %v960
        %1070 = vmatpush.bf16.msra.mxu0 %v957
        %1071 = vmatpush.bf16.msra.mxu0 %v954
        %1072 = vmatpush.bf16.msra.mxu0 %v951
        %1073 = vmatpush.bf16.msra.mxu0 %v948
        %1074 = vmatpush.bf16.msra.mxu0 %v945
        %1075 = vmatmul.bf16.gmra.mxu0 %v656
        %v1076 = vpop.f32.mrf.mxu0
        %v1077 = vadd.f32 %v1064, %v1076
        %v1078 = vpop.f32.mrf.mxu0
        %1079 = vdwg.mxu0
        %1080 = vmatpush.bf16.msra.mxu0 %v919
        %1081 = vmatpush.bf16.msra.mxu0 %v916
        %1082 = vmatpush.bf16.msra.mxu0 %v913
        %1083 = vmatpush.bf16.msra.mxu0 %v910
        %1084 = vmatpush.bf16.msra.mxu0 %v907
        %1085 = vmatpush.bf16.msra.mxu0 %v904
        %1086 = vmatpush.bf16.msra.mxu0 %v901
        %1087 = vmatpush.bf16.msra.mxu0 %v898
        %1088 = vmatmul.bf16.gmra.mxu0 %v654
        %v1089 = vpop.f32.mrf.mxu0
        %v1090 = vadd.f32 0.0, %v1089
        %v1091 = vpop.f32.mrf.mxu0
        %1092 = vdwg.mxu0
        %1093 = vmatpush.bf16.msra.mxu0 %v943
        %1094 = vmatpush.bf16.msra.mxu0 %v940
        %1095 = vmatpush.bf16.msra.mxu0 %v937
        %1096 = vmatpush.bf16.msra.mxu0 %v934
        %1097 = vmatpush.bf16.msra.mxu0 %v931
        %1098 = vmatpush.bf16.msra.mxu0 %v928
        %1099 = vmatpush.bf16.msra.mxu0 %v925
        %1100 = vmatpush.bf16.msra.mxu0 %v922
        %1101 = vmatmul.bf16.gmra.mxu0 %v655
        %v1102 = vpop.f32.mrf.mxu0
        %v1103 = vadd.f32 %v1090, %v1102
        %v1104 = vpop.f32.mrf.mxu0
        %1105 = vdwg.mxu0
        %1106 = vmatpush.bf16.msra.mxu0 %v967
        %1107 = vmatpush.bf16.msra.mxu0 %v964
        %1108 = vmatpush.bf16.msra.mxu0 %v961
        %1109 = vmatpush.bf16.msra.mxu0 %v958
        %1110 = vmatpush.bf16.msra.mxu0 %v955
        %1111 = vmatpush.bf16.msra.mxu0 %v952
        %1112 = vmatpush.bf16.msra.mxu0 %v949
        %1113 = vmatpush.bf16.msra.mxu0 %v946
        %1114 = vmatmul.bf16.gmra.mxu0 %v656
        %v1115 = vpop.f32.mrf.mxu0
        %v1116 = vadd.f32 %v1103, %v1115
        %v1117 = vpop.f32.mrf.mxu0
        %1118 = vdwg.mxu0
        %1119 = vmatpush.bf16.msra.mxu0 %v920
        %1120 = vmatpush.bf16.msra.mxu0 %v917
        %1121 = vmatpush.bf16.msra.mxu0 %v914
        %1122 = vmatpush.bf16.msra.mxu0 %v911
        %1123 = vmatpush.bf16.msra.mxu0 %v908
        %1124 = vmatpush.bf16.msra.mxu0 %v905
        %1125 = vmatpush.bf16.msra.mxu0 %v902
        %1126 = vmatpush.bf16.msra.mxu0 %v899
        %1127 = vmatmul.bf16.gmra.mxu0 %v654
        %v1128 = vpop.f32.mrf.mxu0
        %v1129 = vadd.f32 0.0, %v1128
        %v1130 = vpop.f32.mrf.mxu0
        %1131 = vdwg.mxu0
        %1132 = vmatpush.bf16.msra.mxu0 %v944
        %1133 = vmatpush.bf16.msra.mxu0 %v941
        %1134 = vmatpush.bf16.msra.mxu0 %v938
        %1135 = vmatpush.bf16.msra.mxu0 %v935
        %1136 = vmatpush.bf16.msra.mxu0 %v932
        %1137 = vmatpush.bf16.msra.mxu0 %v929
        %1138 = vmatpush.bf16.msra.mxu0 %v926
        %1139 = vmatpush.bf16.msra.mxu0 %v923
        %1140 = vmatmul.bf16.gmra.mxu0 %v655
        %v1141 = vpop.f32.mrf.mxu0
        %v1142 = vadd.f32 %v1129, %v1141
        %v1143 = vpop.f32.mrf.mxu0
        %1144 = vdwg.mxu0
        %1145 = vmatpush.bf16.msra.mxu0 %v968
        %1146 = vmatpush.bf16.msra.mxu0 %v965
        %1147 = vmatpush.bf16.msra.mxu0 %v962
        %1148 = vmatpush.bf16.msra.mxu0 %v959
        %1149 = vmatpush.bf16.msra.mxu0 %v956
        %1150 = vmatpush.bf16.msra.mxu0 %v953
        %1151 = vmatpush.bf16.msra.mxu0 %v950
        %1152 = vmatpush.bf16.msra.mxu0 %v947
        %1153 = vmatmul.bf16.gmra.mxu0 %v656
        %v1154 = vpop.f32.mrf.mxu0
        %v1155 = vadd.f32 %v1142, %v1154
        %v1156 = vpop.f32.mrf.mxu0
        %1157 = vdwg.mxu0
        %v1158 = vsel %vm548, %v1077, 0.0
        %v1159 = vrot.slane %v1158, 4
        %v1160 = vadd.f32 %v1158, %v1159
        %v1161 = vrot.slane %v1160, 2
        %v1162 = vadd.f32 %v1160, %v1161
        %v1163 = vrot.slane %v1162, 1
        %v1164 = vadd.f32 %v1162, %v1163
        %v1165 = vsel %vm548, %v1116, 0.0
        %v1166 = vrot.slane %v1165, 4
        %v1167 = vadd.f32 %v1165, %v1166
        %v1168 = vrot.slane %v1167, 2
        %v1169 = vadd.f32 %v1167, %v1168
        %v1170 = vrot.slane %v1169, 1
        %v1171 = vadd.f32 %v1169, %v1170
        %v1172 = vsel %vm548, %v1155, 0.0
        %v1173 = vrot.slane %v1172, 4
        %v1174 = vadd.f32 %v1172, %v1173
        %v1175 = vrot.slane %v1174, 2
        %v1176 = vadd.f32 %v1174, %v1175
        %v1177 = vrot.slane %v1176, 1
        %v1178 = vadd.f32 %v1176, %v1177
        %v1179 = vmul.f32 %v1164, 0.25
        %v1180 = vmul.f32 %v1171, 0.25
        %v1181 = vmul.f32 %v1178, 0.25
        %v1182 = vsub.f32 %v1077, %v1179
        %v1183 = vsub.f32 %v1116, %v1180
        %v1184 = vsub.f32 %v1155, %v1181
        %v1185 = vmul.f32 %v1182, %v1182
        %v1186 = vmul.f32 %v1183, %v1183
        %v1187 = vmul.f32 %v1184, %v1184
        %v1188 = vsel %vm548, %v1185, 0.0
        %v1189 = vrot.slane %v1188, 4
        %v1190 = vadd.f32 %v1188, %v1189
        %v1191 = vrot.slane %v1190, 2
        %v1192 = vadd.f32 %v1190, %v1191
        %v1193 = vrot.slane %v1192, 1
        %v1194 = vadd.f32 %v1192, %v1193
        %v1195 = vsel %vm548, %v1186, 0.0
        %v1196 = vrot.slane %v1195, 4
        %v1197 = vadd.f32 %v1195, %v1196
        %v1198 = vrot.slane %v1197, 2
        %v1199 = vadd.f32 %v1197, %v1198
        %v1200 = vrot.slane %v1199, 1
        %v1201 = vadd.f32 %v1199, %v1200
        %v1202 = vsel %vm548, %v1187, 0.0
        %v1203 = vrot.slane %v1202, 4
        %v1204 = vadd.f32 %v1202, %v1203
        %v1205 = vrot.slane %v1204, 2
        %v1206 = vadd.f32 %v1204, %v1205
        %v1207 = vrot.slane %v1206, 1
        %v1208 = vadd.f32 %v1206, %v1207
        %v1209 = vmul.f32 %v1194, 0.25
        %v1210 = vmul.f32 %v1201, 0.25
        %v1211 = vmul.f32 %v1208, 0.25
        %v1212 = vadd.f32 %v1209, 1e-05
        %v1213 = vadd.f32 %v1210, 1e-05
        %v1214 = vadd.f32 %v1211, 1e-05
        %v1215 = vrsqrt.pop %v1212
        %v1216 = vmul.f32 %v1215, %v1212
        %v1217 = vmul.f32 %v1216, %v1215
        %v1218 = vmul.f32 0.5, %v1217
        %v1219 = vsub.f32 1.5, %v1218
        %v1220 = vmul.f32 %v1215, %v1219
        %vm1221 = vweird.f32 %v1212
        %vm1222 = vweird.f32 %v1215
        %vm1223 = vmor %vm1221, %vm1222
        %v1224 = vsel %vm1223, %v1215, %v1220
        %v1225 = vrsqrt.pop %v1213
        %v1226 = vmul.f32 %v1225, %v1213
        %v1227 = vmul.f32 %v1226, %v1225
        %v1228 = vmul.f32 0.5, %v1227
        %v1229 = vsub.f32 1.5, %v1228
        %v1230 = vmul.f32 %v1225, %v1229
        %vm1231 = vweird.f32 %v1213
        %vm1232 = vweird.f32 %v1225
        %vm1233 = vmor %vm1231, %vm1232
        %v1234 = vsel %vm1233, %v1225, %v1230
        %v1235 = vrsqrt.pop %v1214
        %v1236 = vmul.f32 %v1235, %v1214
        %v1237 = vmul.f32 %v1236, %v1235
        %v1238 = vmul.f32 0.5, %v1237
        %v1239 = vsub.f32 1.5, %v1238
        %v1240 = vmul.f32 %v1235, %v1239
        %vm1241 = vweird.f32 %v1214
        %vm1242 = vweird.f32 %v1235
        %vm1243 = vmor %vm1241, %vm1242
        %v1244 = vsel %vm1243, %v1235, %v1240
        %v1245 = vmul.f32 %v1224, %v288
        %v1246 = vmul.f32 %v1234, %v289
        %v1247 = vmul.f32 %v1244, %v290
        %v1248 = vperm.slane %v1245, 2
        %v1249 = vperm.slane %v1246, 2
        %v1250 = vperm.slane %v1247, 2
        %v1251 = vmul.f32 %v1182, %v1248
        %v1252 = vmul.f32 %v1183, %v1249
        %v1253 = vmul.f32 %v1184, %v1250
        %v1254 = vperm.slane %v288, 3
        %v1255 = vperm.slane %v289, 3
        %v1256 = vperm.slane %v290, 3
        %v1257 = vadd.f32 %v1251, %v1254
        %v1258 = vadd.f32 %v1252, %v1255
        %v1259 = vadd.f32 %v1253, %v1256
        %v1260 = vmax.f32 %v1257, 0.0
        %v1261 = vmax.f32 %v1258, 0.0
        %v1262 = vmax.f32 %v1259, 0.0
        %v1263 = vpack.c.bf16 %v1260, %v1260
        %v1264 = vpack.c.bf16 %v1261, %v1261
        %v1265 = vpack.c.bf16 %v1262, %v1262
        %v1362 = vunpack.c.l.b16 %v391
        %v1363 = vunpack.c.h.b16 %v391
        %v1364 = vunpack.c.l.b16 %v392
        %v1365 = vunpack.c.l.b16 %v393
        %v1366 = vunpack.c.h.b16 %v393
        %v1367 = vunpack.c.l.b16 %v394
        %v1368 = vunpack.c.l.b16 %v395
        %v1369 = vunpack.c.h.b16 %v395
        %v1370 = vunpack.c.l.b16 %v396
        %v1371 = vunpack.c.l.b16 %v397
        %v1372 = vunpack.c.h.b16 %v397
        %v1373 = vunpack.c.l.b16 %v398
        %v1374 = vunpack.c.l.b16 %v399
        %v1375 = vunpack.c.h.b16 %v399
        %v1376 = vunpack.c.l.b16 %v400
        %v1377 = vunpack.c.l.b16 %v401
        %v1378 = vunpack.c.h.b16 %v401
        %v1379 = vunpack.c.l.b16 %v402
        %v1380 = vunpack.c.l.b16 %v403
        %v1381 = vunpack.c.h.b16 %v403
        %v1382 = vunpack.c.l.b16 %v404
        %v1383 = vunpack.c.l.b16 %v405
        %v1384 = vunpack.c.h.b16 %v405
        %v1385 = vunpack.c.l.b16 %v406
        %v1386 = vunpack.c.l.b16 %v407
        %v1387 = vunpack.c.h.b16 %v407
        %v1388 = vunpack.c.l.b16 %v408
        %v1389 = vunpack.c.l.b16 %v409
        %v1390 = vunpack.c.h.b16 %v409
        %v1391 = vunpack.c.l.b16 %v410
        %v1392 = vunpack.c.l.b16 %v411
        %v1393 = vunpack.c.h.b16 %v411
        %v1394 = vunpack.c.l.b16 %v412
        %v1395 = vunpack.c.l.b16 %v413
        %v1396 = vunpack.c.h.b16 %v413
        %v1397 = vunpack.c.l.b16 %v414
        %v1398 = vunpack.c.l.b16 %v415
        %v1399 = vunpack.c.h.b16 %v415
        %v1400 = vunpack.c.l.b16 %v416
        %v1401 = vunpack.c.l.b16 %v417
        %v1402 = vunpack.c.h.b16 %v417
        %v1403 = vunpack.c.l.b16 %v418
        %v1404 = vunpack.c.l.b16 %v419
        %v1405 = vunpack.c.h.b16 %v419
        %v1406 = vunpack.c.l.b16 %v420
        %v1407 = vunpack.c.l.b16 %v421
        %v1408 = vunpack.c.h.b16 %v421
        %v1409 = vunpack.c.l.b16 %v422
        %v1410 = vunpack.c.l.b16 %v423
        %v1411 = vunpack.c.h.b16 %v423
        %v1412 = vunpack.c.l.b16 %v424
        %v1413 = vunpack.c.l.b16 %v425
        %v1414 = vunpack.c.h.b16 %v425
        %v1415 = vunpack.c.l.b16 %v426
        %v1416 = vunpack.c.l.b16 %v427
        %v1417 = vunpack.c.h.b16 %v427
        %v1418 = vunpack.c.l.b16 %v428
        %v1419 = vunpack.c.l.b16 %v429
        %v1420 = vunpack.c.h.b16 %v429
        %v1421 = vunpack.c.l.b16 %v430
        %v1422 = vunpack.c.l.b16 %v431
        %v1423 = vunpack.c.h.b16 %v431
        %v1424 = vunpack.c.l.b16 %v432
        %v1425 = vunpack.c.l.b16 %v433
        %v1426 = vunpack.c.h.b16 %v433
        %v1427 = vunpack.c.l.b16 %v434
        %v1428 = vunpack.c.l.b16 %v435
        %v1429 = vunpack.c.h.b16 %v435
        %v1430 = vunpack.c.l.b16 %v436
        %v1431 = vunpack.c.l.b16 %v437
        %v1432 = vunpack.c.h.b16 %v437
        %v1433 = vunpack.c.l.b16 %v438
        %v1434 = vunpack.c.l.b16 %v439
        %v1435 = vunpack.c.h.b16 %v439
        %v1436 = vunpack.c.l.b16 %v440
        %v1437 = vunpack.c.l.b16 %v441
        %v1438 = vunpack.c.h.b16 %v441
        %v1439 = vunpack.c.l.b16 %v442
        %v1440 = vunpack.c.l.b16 %v443
        %v1441 = vunpack.c.h.b16 %v443
        %v1442 = vunpack.c.l.b16 %v444
        %v1443 = vunpack.c.l.b16 %v445
        %v1444 = vunpack.c.h.b16 %v445
        %v1445 = vunpack.c.l.b16 %v446
        %v1446 = vunpack.c.l.b16 %v447
        %v1447 = vunpack.c.h.b16 %v447
        %v1448 = vunpack.c.l.b16 %v448
        %v1449 = vunpack.c.l.b16 %v449
        %v1450 = vunpack.c.h.b16 %v449
        %v1451 = vunpack.c.l.b16 %v450
        %v1452 = vunpack.c.l.b16 %v451
        %v1453 = vunpack.c.h.b16 %v451
        %v1454 = vunpack.c.l.b16 %v452
        %v1455 = vunpack.c.l.b16 %v453
        %v1456 = vunpack.c.h.b16 %v453
        %v1457 = vunpack.c.l.b16 %v454
        %v1458 = vunpack.c.l.b16 %v455
        %v1459 = vunpack.c.h.b16 %v455
        %v1460 = vunpack.c.l.b16 %v456
        %v1461 = vunpack.c.l.b16 %v457
        %v1462 = vunpack.c.h.b16 %v457
        %v1463 = vunpack.c.l.b16 %v458
        %v1464 = vunpack.c.l.b16 %v459
        %v1465 = vunpack.c.h.b16 %v459
        %v1466 = vunpack.c.l.b16 %v460
        %v1467 = vunpack.c.l.b16 %v461
        %v1468 = vunpack.c.h.b16 %v461
        %v1469 = vunpack.c.l.b16 %v462
        %v1470 = vunpack.c.l.b16 %v463
        %v1471 = vunpack.c.h.b16 %v463
        %v1472 = vunpack.c.l.b16 %v464
        %v1473 = vunpack.c.l.b16 %v465
        %v1474 = vunpack.c.h.b16 %v465
        %v1475 = vunpack.c.l.b16 %v466
        %v1476 = vunpack.c.l.b16 %v467
        %v1477 = vunpack.c.h.b16 %v467
        %v1478 = vunpack.c.l.b16 %v468
        %v1479 = vunpack.c.l.b16 %v469
        %v1480 = vunpack.c.h.b16 %v469
        %v1481 = vunpack.c.l.b16 %v470
        %v1482 = vunpack.c.l.b16 %v471
        %v1483 = vunpack.c.h.b16 %v471
        %v1484 = vunpack.c.l.b16 %v472
        %v1485 = vunpack.c.l.b16 %v473
        %v1486 = vunpack.c.h.b16 %v473
        %v1487 = vunpack.c.l.b16 %v474
        %v1488 = vunpack.c.l.b16 %v475
        %v1489 = vunpack.c.h.b16 %v475
        %v1490 = vunpack.c.l.b16 %v476
        %v1491 = vunpack.c.l.b16 %v477
        %v1492 = vunpack.c.h.b16 %v477
        %v1493 = vunpack.c.l.b16 %v478
        %v1494 = vunpack.c.l.b16 %v479
        %v1495 = vunpack.c.h.b16 %v479
        %v1496 = vunpack.c.l.b16 %v480
        %v1497 = vunpack.c.l.b16 %v481
        %v1498 = vunpack.c.h.b16 %v481
        %v1499 = vunpack.c.l.b16 %v482
        %v1500 = vunpack.c.l.b16 %v483
        %v1501 = vunpack.c.h.b16 %v483
        %v1502 = vunpack.c.l.b16 %v484
        %v1503 = vunpack.c.l.b16 %v485
        %v1504 = vunpack.c.h.b16 %v485
        %v1505 = vunpack.c.l.b16 %v486
        %v1506 = vpack.c.b16 %v1365, %v1362
        %v1507 = vpack.c.b16 %v1366, %v1363
        %v1508 = vpack.c.b16 %v1367, %v1364
        %v1509 = vpack.c.b16 %v1371, %v1368
        %v1510 = vpack.c.b16 %v1372, %v1369
        %v1511 = vpack.c.b16 %v1373, %v1370
        %v1512 = vpack.c.b16 %v1377, %v1374
        %v1513 = vpack.c.b16 %v1378, %v1375
        %v1514 = vpack.c.b16 %v1379, %v1376
        %v1515 = vpack.c.b16 %v1383, %v1380
        %v1516 = vpack.c.b16 %v1384, %v1381
        %v1517 = vpack.c.b16 %v1385, %v1382
        %v1518 = vpack.c.b16 %v1389, %v1386
        %v1519 = vpack.c.b16 %v1390, %v1387
        %v1520 = vpack.c.b16 %v1391, %v1388
        %v1521 = vpack.c.b16 %v1395, %v1392
        %v1522 = vpack.c.b16 %v1396, %v1393
        %v1523 = vpack.c.b16 %v1397, %v1394
        %v1524 = vpack.c.b16 %v1401, %v1398
        %v1525 = vpack.c.b16 %v1402, %v1399
        %v1526 = vpack.c.b16 %v1403, %v1400
        %v1527 = vpack.c.b16 %v1407, %v1404
        %v1528 = vpack.c.b16 %v1408, %v1405
        %v1529 = vpack.c.b16 %v1409, %v1406
        %v1530 = vpack.c.b16 %v1413, %v1410
        %v1531 = vpack.c.b16 %v1414, %v1411
        %v1532 = vpack.c.b16 %v1415, %v1412
        %v1533 = vpack.c.b16 %v1419, %v1416
        %v1534 = vpack.c.b16 %v1420, %v1417
        %v1535 = vpack.c.b16 %v1421, %v1418
        %v1536 = vpack.c.b16 %v1425, %v1422
        %v1537 = vpack.c.b16 %v1426, %v1423
        %v1538 = vpack.c.b16 %v1427, %v1424
        %v1539 = vpack.c.b16 %v1431, %v1428
        %v1540 = vpack.c.b16 %v1432, %v1429
        %v1541 = vpack.c.b16 %v1433, %v1430
        %v1542 = vpack.c.b16 %v1437, %v1434
        %v1543 = vpack.c.b16 %v1438, %v1435
        %v1544 = vpack.c.b16 %v1439, %v1436
        %v1545 = vpack.c.b16 %v1443, %v1440
        %v1546 = vpack.c.b16 %v1444, %v1441
        %v1547 = vpack.c.b16 %v1445, %v1442
        %v1548 = vpack.c.b16 %v1449, %v1446
        %v1549 = vpack.c.b16 %v1450, %v1447
        %v1550 = vpack.c.b16 %v1451, %v1448
        %v1551 = vpack.c.b16 %v1455, %v1452
        %v1552 = vpack.c.b16 %v1456, %v1453
        %v1553 = vpack.c.b16 %v1457, %v1454
        %v1554 = vpack.c.b16 %v1461, %v1458
        %v1555 = vpack.c.b16 %v1462, %v1459
        %v1556 = vpack.c.b16 %v1463, %v1460
        %v1557 = vpack.c.b16 %v1467, %v1464
        %v1558 = vpack.c.b16 %v1468, %v1465
        %v1559 = vpack.c.b16 %v1469, %v1466
        %v1560 = vpack.c.b16 %v1473, %v1470
        %v1561 = vpack.c.b16 %v1474, %v1471
        %v1562 = vpack.c.b16 %v1475, %v1472
        %v1563 = vpack.c.b16 %v1479, %v1476
        %v1564 = vpack.c.b16 %v1480, %v1477
        %v1565 = vpack.c.b16 %v1481, %v1478
        %v1566 = vpack.c.b16 %v1485, %v1482
        %v1567 = vpack.c.b16 %v1486, %v1483
        %v1568 = vpack.c.b16 %v1487, %v1484
        %v1569 = vpack.c.b16 %v1491, %v1488
        %v1570 = vpack.c.b16 %v1492, %v1489
        %v1571 = vpack.c.b16 %v1493, %v1490
        %v1572 = vpack.c.b16 %v1497, %v1494
        %v1573 = vpack.c.b16 %v1498, %v1495
        %v1574 = vpack.c.b16 %v1499, %v1496
        %v1575 = vpack.c.b16 %v1503, %v1500
        %v1576 = vpack.c.b16 %v1504, %v1501
        %v1577 = vpack.c.b16 %v1505, %v1502
        %1650 = vmatpush.bf16.msra.mxu0 %v1527
        %1651 = vmatpush.bf16.msra.mxu0 %v1524
        %1652 = vmatpush.bf16.msra.mxu0 %v1521
        %1653 = vmatpush.bf16.msra.mxu0 %v1518
        %1654 = vmatpush.bf16.msra.mxu0 %v1515
        %1655 = vmatpush.bf16.msra.mxu0 %v1512
        %1656 = vmatpush.bf16.msra.mxu0 %v1509
        %1657 = vmatpush.bf16.msra.mxu0 %v1506
        %1658 = vmatmul.bf16.gmra.mxu0 %v1263
        %v1659 = vpop.f32.mrf.mxu0
        %v1660 = vadd.f32 0.0, %v1659
        %v1661 = vpop.f32.mrf.mxu0
        %1662 = vdwg.mxu0
        %1663 = vmatpush.bf16.msra.mxu0 %v1551
        %1664 = vmatpush.bf16.msra.mxu0 %v1548
        %1665 = vmatpush.bf16.msra.mxu0 %v1545
        %1666 = vmatpush.bf16.msra.mxu0 %v1542
        %1667 = vmatpush.bf16.msra.mxu0 %v1539
        %1668 = vmatpush.bf16.msra.mxu0 %v1536
        %1669 = vmatpush.bf16.msra.mxu0 %v1533
        %1670 = vmatpush.bf16.msra.mxu0 %v1530
        %1671 = vmatmul.bf16.gmra.mxu0 %v1264
        %v1672 = vpop.f32.mrf.mxu0
        %v1673 = vadd.f32 %v1660, %v1672
        %v1674 = vpop.f32.mrf.mxu0
        %1675 = vdwg.mxu0
        %1676 = vmatpush.bf16.msra.mxu0 %v1575
        %1677 = vmatpush.bf16.msra.mxu0 %v1572
        %1678 = vmatpush.bf16.msra.mxu0 %v1569
        %1679 = vmatpush.bf16.msra.mxu0 %v1566
        %1680 = vmatpush.bf16.msra.mxu0 %v1563
        %1681 = vmatpush.bf16.msra.mxu0 %v1560
        %1682 = vmatpush.bf16.msra.mxu0 %v1557
        %1683 = vmatpush.bf16.msra.mxu0 %v1554
        %1684 = vmatmul.bf16.gmra.mxu0 %v1265
        %v1685 = vpop.f32.mrf.mxu0
        %v1686 = vadd.f32 %v1673, %v1685
        %v1687 = vpop.f32.mrf.mxu0
        %1688 = vdwg.mxu0
        %1689 = vmatpush.bf16.msra.mxu0 %v1528
        %1690 = vmatpush.bf16.msra.mxu0 %v1525
        %1691 = vmatpush.bf16.msra.mxu0 %v1522
        %1692 = vmatpush.bf16.msra.mxu0 %v1519
        %1693 = vmatpush.bf16.msra.mxu0 %v1516
        %1694 = vmatpush.bf16.msra.mxu0 %v1513
        %1695 = vmatpush.bf16.msra.mxu0 %v1510
        %1696 = vmatpush.bf16.msra.mxu0 %v1507
        %1697 = vmatmul.bf16.gmra.mxu0 %v1263
        %v1698 = vpop.f32.mrf.mxu0
        %v1699 = vadd.f32 0.0, %v1698
        %v1700 = vpop.f32.mrf.mxu0
        %1701 = vdwg.mxu0
        %1702 = vmatpush.bf16.msra.mxu0 %v1552
        %1703 = vmatpush.bf16.msra.mxu0 %v1549
        %1704 = vmatpush.bf16.msra.mxu0 %v1546
        %1705 = vmatpush.bf16.msra.mxu0 %v1543
        %1706 = vmatpush.bf16.msra.mxu0 %v1540
        %1707 = vmatpush.bf16.msra.mxu0 %v1537
        %1708 = vmatpush.bf16.msra.mxu0 %v1534
        %1709 = vmatpush.bf16.msra.mxu0 %v1531
        %1710 = vmatmul.bf16.gmra.mxu0 %v1264
        %v1711 = vpop.f32.mrf.mxu0
        %v1712 = vadd.f32 %v1699, %v1711
        %v1713 = vpop.f32.mrf.mxu0
        %1714 = vdwg.mxu0
        %1715 = vmatpush.bf16.msra.mxu0 %v1576
        %1716 = vmatpush.bf16.msra.mxu0 %v1573
        %1717 = vmatpush.bf16.msra.mxu0 %v1570
        %1718 = vmatpush.bf16.msra.mxu0 %v1567
        %1719 = vmatpush.bf16.msra.mxu0 %v1564
        %1720 = vmatpush.bf16.msra.mxu0 %v1561
        %1721 = vmatpush.bf16.msra.mxu0 %v1558
        %1722 = vmatpush.bf16.msra.mxu0 %v1555
        %1723 = vmatmul.bf16.gmra.mxu0 %v1265
        %v1724 = vpop.f32.mrf.mxu0
        %v1725 = vadd.f32 %v1712, %v1724
        %v1726 = vpop.f32.mrf.mxu0
        %1727 = vdwg.mxu0
        %1728 = vmatpush.bf16.msra.mxu0 %v1529
        %1729 = vmatpush.bf16.msra.mxu0 %v1526
        %1730 = vmatpush.bf16.msra.mxu0 %v1523
        %1731 = vmatpush.bf16.msra.mxu0 %v1520
        %1732 = vmatpush.bf16.msra.mxu0 %v1517
        %1733 = vmatpush.bf16.msra.mxu0 %v1514
        %1734 = vmatpush.bf16.msra.mxu0 %v1511
        %1735 = vmatpush.bf16.msra.mxu0 %v1508
        %1736 = vmatmul.bf16.gmra.mxu0 %v1263
        %v1737 = vpop.f32.mrf.mxu0
        %v1738 = vadd.f32 0.0, %v1737
        %v1739 = vpop.f32.mrf.mxu0
        %1740 = vdwg.mxu0
        %1741 = vmatpush.bf16.msra.mxu0 %v1553
        %1742 = vmatpush.bf16.msra.mxu0 %v1550
        %1743 = vmatpush.bf16.msra.mxu0 %v1547
        %1744 = vmatpush.bf16.msra.mxu0 %v1544
        %1745 = vmatpush.bf16.msra.mxu0 %v1541
        %1746 = vmatpush.bf16.msra.mxu0 %v1538
        %1747 = vmatpush.bf16.msra.mxu0 %v1535
        %1748 = vmatpush.bf16.msra.mxu0 %v1532
        %1749 = vmatmul.bf16.gmra.mxu0 %v1264
        %v1750 = vpop.f32.mrf.mxu0
        %v1751 = vadd.f32 %v1738, %v1750
        %v1752 = vpop.f32.mrf.mxu0
        %1753 = vdwg.mxu0
        %1754 = vmatpush.bf16.msra.mxu0 %v1577
        %1755 = vmatpush.bf16.msra.mxu0 %v1574
        %1756 = vmatpush.bf16.msra.mxu0 %v1571
        %1757 = vmatpush.bf16.msra.mxu0 %v1568
        %1758 = vmatpush.bf16.msra.mxu0 %v1565
        %1759 = vmatpush.bf16.msra.mxu0 %v1562
        %1760 = vmatpush.bf16.msra.mxu0 %v1559
        %1761 = vmatpush.bf16.msra.mxu0 %v1556
        %1762 = vmatmul.bf16.gmra.mxu0 %v1265
        %v1763 = vpop.f32.mrf.mxu0
        %v1764 = vadd.f32 %v1751, %v1763
        %v1765 = vpop.f32.mrf.mxu0
        %1766 = vdwg.mxu0
        %v1767 = vsel %vm548, %v1686, 0.0
        %v1768 = vrot.slane %v1767, 4
        %v1769 = vadd.f32 %v1767, %v1768
        %v1770 = vrot.slane %v1769, 2
        %v1771 = vadd.f32 %v1769, %v1770
        %v1772 = vrot.slane %v1771, 1
        %v1773 = vadd.f32 %v1771, %v1772
        %v1774 = vsel %vm548, %v1725, 0.0
        %v1775 = vrot.slane %v1774, 4
        %v1776 = vadd.f32 %v1774, %v1775
        %v1777 = vrot.slane %v1776, 2
        %v1778 = vadd.f32 %v1776, %v1777
        %v1779 = vrot.slane %v1778, 1
        %v1780 = vadd.f32 %v1778, %v1779
        %v1781 = vsel %vm548, %v1764, 0.0
        %v1782 = vrot.slane %v1781, 4
        %v1783 = vadd.f32 %v1781, %v1782
        %v1784 = vrot.slane %v1783, 2
        %v1785 = vadd.f32 %v1783, %v1784
        %v1786 = vrot.slane %v1785, 1
        %v1787 = vadd.f32 %v1785, %v1786
        %v1788 = vmul.f32 %v1773, 0.25
        %v1789 = vmul.f32 %v1780, 0.25
        %v1790 = vmul.f32 %v1787, 0.25
        %v1791 = vsub.f32 %v1686, %v1788
        %v1792 = vsub.f32 %v1725, %v1789
        %v1793 = vsub.f32 %v1764, %v1790
        %v1794 = vmul.f32 %v1791, %v1791
        %v1795 = vmul.f32 %v1792, %v1792
        %v1796 = vmul.f32 %v1793, %v1793
        %v1797 = vsel %vm548, %v1794, 0.0
        %v1798 = vrot.slane %v1797, 4
        %v1799 = vadd.f32 %v1797, %v1798
        %v1800 = vrot.slane %v1799, 2
        %v1801 = vadd.f32 %v1799, %v1800
        %v1802 = vrot.slane %v1801, 1
        %v1803 = vadd.f32 %v1801, %v1802
        %v1804 = vsel %vm548, %v1795, 0.0
        %v1805 = vrot.slane %v1804, 4
        %v1806 = vadd.f32 %v1804, %v1805
        %v1807 = vrot.slane %v1806, 2
        %v1808 = vadd.f32 %v1806, %v1807
        %v1809 = vrot.slane %v1808, 1
        %v1810 = vadd.f32 %v1808, %v1809
        %v1811 = vsel %vm548, %v1796, 0.0
        %v1812 = vrot.slane %v1811, 4
        %v1813 = vadd.f32 %v1811, %v1812
        %v1814 = vrot.slane %v1813, 2
        %v1815 = vadd.f32 %v1813, %v1814
        %v1816 = vrot.slane %v1815, 1
        %v1817 = vadd.f32 %v1815, %v1816
        %v1818 = vmul.f32 %v1803, 0.25
        %v1819 = vmul.f32 %v1810, 0.25
        %v1820 = vmul.f32 %v1817, 0.25
        %v1821 = vadd.f32 %v1818, 1e-05
        %v1822 = vadd.f32 %v1819, 1e-05
        %v1823 = vadd.f32 %v1820, 1e-05
        %v1824 = vrsqrt.pop %v1821
        %v1825 = vmul.f32 %v1824, %v1821
        %v1826 = vmul.f32 %v1825, %v1824
        %v1827 = vmul.f32 0.5, %v1826
        %v1828 = vsub.f32 1.5, %v1827
        %v1829 = vmul.f32 %v1824, %v1828
        %vm1830 = vweird.f32 %v1821
        %vm1831 = vweird.f32 %v1824
        %vm1832 = vmor %vm1830, %vm1831
        %v1833 = vsel %vm1832, %v1824, %v1829
        %v1834 = vrsqrt.pop %v1822
        %v1835 = vmul.f32 %v1834, %v1822
        %v1836 = vmul.f32 %v1835, %v1834
        %v1837 = vmul.f32 0.5, %v1836
        %v1838 = vsub.f32 1.5, %v1837
        %v1839 = vmul.f32 %v1834, %v1838
        %vm1840 = vweird.f32 %v1822
        %vm1841 = vweird.f32 %v1834
        %vm1842 = vmor %vm1840, %vm1841
        %v1843 = vsel %vm1842, %v1834, %v1839
        %v1844 = vrsqrt.pop %v1823
        %v1845 = vmul.f32 %v1844, %v1823
        %v1846 = vmul.f32 %v1845, %v1844
        %v1847 = vmul.f32 0.5, %v1846
        %v1848 = vsub.f32 1.5, %v1847
        %v1849 = vmul.f32 %v1844, %v1848
        %vm1850 = vweird.f32 %v1823
        %vm1851 = vweird.f32 %v1844
        %vm1852 = vmor %vm1850, %vm1851
        %v1853 = vsel %vm1852, %v1844, %v1849
        %v1854 = vmul.f32 %v1833, %v288
        %v1855 = vmul.f32 %v1843, %v289
        %v1856 = vmul.f32 %v1853, %v290
        %v1857 = vperm.slane %v1854, 4
        %v1858 = vperm.slane %v1855, 4
        %v1859 = vperm.slane %v1856, 4
        %v1860 = vmul.f32 %v1791, %v1857
        %v1861 = vmul.f32 %v1792, %v1858
        %v1862 = vmul.f32 %v1793, %v1859
        %v1863 = vperm.slane %v288, 5
        %v1864 = vperm.slane %v289, 5
        %v1865 = vperm.slane %v290, 5
        %v1866 = vadd.f32 %v1860, %v1863
        %v1867 = vadd.f32 %v1861, %v1864
        %v1868 = vadd.f32 %v1862, %v1865
        %v1869 = vmax.f32 %v1866, 0.0
        %v1870 = vmax.f32 %v1867, 0.0
        %v1871 = vmax.f32 %v1868, 0.0
        %v1872 = vpack.c.bf16 %v1869, %v1869
        %v1873 = vpack.c.bf16 %v1870, %v1870
        %v1874 = vpack.c.bf16 %v1871, %v1871
        %v1875 = vld [vmem:[#allocation4] sm:$0xf]
        %v1876 = vld [vmem:[#allocation4 + $0x4] sm:$0xf]
        %v1877 = vld [vmem:[#allocation4 + $0x8] sm:$0xf]
        %v1878 = vld [vmem:[#allocation4 + $0xc] sm:$0xf]
        %v1879 = vld [vmem:[#allocation4 + $0x10] sm:$0xf]
        %v1880 = vld [vmem:[#allocation4 + $0x14] sm:$0xf]
        %v1881 = vld [vmem:[#allocation4 + $0x18] sm:$0xf]
        %v1882 = vld [vmem:[#allocation4 + $0x1c] sm:$0xf]
        %v1883 = vld [vmem:[#allocation4 + $0x20] sm:$0xf]
        %v1884 = vld [vmem:[#allocation4 + $0x24] sm:$0xf]
        %v1885 = vld [vmem:[#allocation4 + $0x28] sm:$0xf]
        %v1886 = vld [vmem:[#allocation4 + $0x2c] sm:$0xf]
        %v1887 = vld [vmem:[#allocation4 + $0x30] sm:$0xf]
        %v1888 = vld [vmem:[#allocation4 + $0x34] sm:$0xf]
        %v1889 = vld [vmem:[#allocation4 + $0x38] sm:$0xf]
        %v1890 = vld [vmem:[#allocation4 + $0x3c] sm:$0xf]
        %v1891 = vld [vmem:[#allocation4 + $0x40] sm:$0xf]
        %v1892 = vld [vmem:[#allocation4 + $0x44] sm:$0xf]
        %v1893 = vld [vmem:[#allocation4 + $0x48] sm:$0xf]
        %v1894 = vld [vmem:[#allocation4 + $0x4c] sm:$0xf]
        %v1895 = vld [vmem:[#allocation4 + $0x50] sm:$0xf]
        %v1896 = vld [vmem:[#allocation4 + $0x54] sm:$0xf]
        %v1897 = vld [vmem:[#allocation4 + $0x58] sm:$0xf]
        %v1898 = vld [vmem:[#allocation4 + $0x5c] sm:$0xf]
        %v1899 = vld [vmem:[#allocation4 + $0x60] sm:$0xf]
        %v1900 = vld [vmem:[#allocation4 + $0x64] sm:$0xf]
        %v1901 = vld [vmem:[#allocation4 + $0x68] sm:$0xf]
        %v1902 = vld [vmem:[#allocation4 + $0x6c] sm:$0xf]
        %v1903 = vld [vmem:[#allocation4 + $0x70] sm:$0xf]
        %v1904 = vld [vmem:[#allocation4 + $0x74] sm:$0xf]
        %v1905 = vld [vmem:[#allocation4 + $0x78] sm:$0xf]
        %v1906 = vld [vmem:[#allocation4 + $0x7c] sm:$0xf]
        %v1907 = vld [vmem:[#allocation4 + $0x80] sm:$0xf]
        %v1908 = vld [vmem:[#allocation4 + $0x84] sm:$0xf]
        %v1909 = vld [vmem:[#allocation4 + $0x88] sm:$0xf]
        %v1910 = vld [vmem:[#allocation4 + $0x8c] sm:$0xf]
        %v1911 = vld [vmem:[#allocation4 + $0x90] sm:$0xf]
        %v1912 = vld [vmem:[#allocation4 + $0x94] sm:$0xf]
        %v1913 = vld [vmem:[#allocation4 + $0x98] sm:$0xf]
        %v1914 = vld [vmem:[#allocation4 + $0x9c] sm:$0xf]
        %v1915 = vld [vmem:[#allocation4 + $0xa0] sm:$0xf]
        %v1916 = vld [vmem:[#allocation4 + $0xa4] sm:$0xf]
        %v1917 = vld [vmem:[#allocation4 + $0xa8] sm:$0xf]
        %v1918 = vld [vmem:[#allocation4 + $0xac] sm:$0xf]
        %v1919 = vld [vmem:[#allocation4 + $0xb0] sm:$0xf]
        %v1920 = vld [vmem:[#allocation4 + $0xb4] sm:$0xf]
        %v1921 = vld [vmem:[#allocation4 + $0xb8] sm:$0xf]
        %v1922 = vld [vmem:[#allocation4 + $0xbc] sm:$0xf]
        %v1923 = vperm.slane %v288, 6
        %v1972 = vunpack.c.l.b16 %v1875
        %v1973 = vunpack.c.l.b16 %v1876
        %v1974 = vunpack.c.l.b16 %v1877
        %v1975 = vunpack.c.l.b16 %v1878
        %v1976 = vunpack.c.l.b16 %v1879
        %v1977 = vunpack.c.l.b16 %v1880
        %v1978 = vunpack.c.l.b16 %v1881
        %v1979 = vunpack.c.l.b16 %v1882
        %v1980 = vunpack.c.l.b16 %v1883
        %v1981 = vunpack.c.l.b16 %v1884
        %v1982 = vunpack.c.l.b16 %v1885
        %v1983 = vunpack.c.l.b16 %v1886
        %v1984 = vunpack.c.l.b16 %v1887
        %v1985 = vunpack.c.l.b16 %v1888
        %v1986 = vunpack.c.l.b16 %v1889
        %v1987 = vunpack.c.l.b16 %v1890
        %v1988 = vunpack.c.l.b16 %v1891
        %v1989 = vunpack.c.l.b16 %v1892
        %v1990 = vunpack.c.l.b16 %v1893
        %v1991 = vunpack.c.l.b16 %v1894
        %v1992 = vunpack.c.l.b16 %v1895
        %v1993 = vunpack.c.l.b16 %v1896
        %v1994 = vunpack.c.l.b16 %v1897
        %v1995 = vunpack.c.l.b16 %v1898
        %v1996 = vunpack.c.l.b16 %v1899
        %v1997 = vunpack.c.l.b16 %v1900
        %v1998 = vunpack.c.l.b16 %v1901
        %v1999 = vunpack.c.l.b16 %v1902
        %v2000 = vunpack.c.l.b16 %v1903
        %v2001 = vunpack.c.l.b16 %v1904
        %v2002 = vunpack.c.l.b16 %v1905
        %v2003 = vunpack.c.l.b16 %v1906
        %v2004 = vunpack.c.l.b16 %v1907
        %v2005 = vunpack.c.l.b16 %v1908
        %v2006 = vunpack.c.l.b16 %v1909
        %v2007 = vunpack.c.l.b16 %v1910
        %v2008 = vunpack.c.l.b16 %v1911
        %v2009 = vunpack.c.l.b16 %v1912
        %v2010 = vunpack.c.l.b16 %v1913
        %v2011 = vunpack.c.l.b16 %v1914
        %v2012 = vunpack.c.l.b16 %v1915
        %v2013 = vunpack.c.l.b16 %v1916
        %v2014 = vunpack.c.l.b16 %v1917
        %v2015 = vunpack.c.l.b16 %v1918
        %v2016 = vunpack.c.l.b16 %v1919
        %v2017 = vunpack.c.l.b16 %v1920
        %v2018 = vunpack.c.l.b16 %v1921
        %v2019 = vunpack.c.l.b16 %v1922
        %v2020 = vpack.c.b16 %v1973, %v1972
        %v2021 = vpack.c.b16 %v1975, %v1974
        %v2022 = vpack.c.b16 %v1977, %v1976
        %v2023 = vpack.c.b16 %v1979, %v1978
        %v2024 = vpack.c.b16 %v1981, %v1980
        %v2025 = vpack.c.b16 %v1983, %v1982
        %v2026 = vpack.c.b16 %v1985, %v1984
        %v2027 = vpack.c.b16 %v1987, %v1986
        %v2028 = vpack.c.b16 %v1989, %v1988
        %v2029 = vpack.c.b16 %v1991, %v1990
        %v2030 = vpack.c.b16 %v1993, %v1992
        %v2031 = vpack.c.b16 %v1995, %v1994
        %v2032 = vpack.c.b16 %v1997, %v1996
        %v2033 = vpack.c.b16 %v1999, %v1998
        %v2034 = vpack.c.b16 %v2001, %v2000
        %v2035 = vpack.c.b16 %v2003, %v2002
        %v2036 = vpack.c.b16 %v2005, %v2004
        %v2037 = vpack.c.b16 %v2007, %v2006
        %v2038 = vpack.c.b16 %v2009, %v2008
        %v2039 = vpack.c.b16 %v2011, %v2010
        %v2040 = vpack.c.b16 %v2013, %v2012
        %v2041 = vpack.c.b16 %v2015, %v2014
        %v2042 = vpack.c.b16 %v2017, %v2016
        %v2043 = vpack.c.b16 %v2019, %v2018
        %2068 = vmatpush.bf16.msra.mxu0 %v2027
        %2069 = vmatpush.bf16.msra.mxu0 %v2026
        %2070 = vmatpush.bf16.msra.mxu0 %v2025
        %2071 = vmatpush.bf16.msra.mxu0 %v2024
        %2072 = vmatpush.bf16.msra.mxu0 %v2023
        %2073 = vmatpush.bf16.msra.mxu0 %v2022
        %2074 = vmatpush.bf16.msra.mxu0 %v2021
        %2075 = vmatpush.bf16.msra.mxu0 %v2020
        %2076 = vmatmul.bf16.gmra.mxu0 %v1872
        %v2077 = vpop.f32.mrf.mxu0
        %v2078 = vadd.f32 %v1923, %v2077
        %v2079 = vpop.f32.mrf.mxu0
        %2080 = vdwg.mxu0
        %2081 = vmatpush.bf16.msra.mxu0 %v2035
        %2082 = vmatpush.bf16.msra.mxu0 %v2034
        %2083 = vmatpush.bf16.msra.mxu0 %v2033
        %2084 = vmatpush.bf16.msra.mxu0 %v2032
        %2085 = vmatpush.bf16.msra.mxu0 %v2031
        %2086 = vmatpush.bf16.msra.mxu0 %v2030
        %2087 = vmatpush.bf16.msra.mxu0 %v2029
        %2088 = vmatpush.bf16.msra.mxu0 %v2028
        %2089 = vmatmul.bf16.gmra.mxu0 %v1873
        %v2090 = vpop.f32.mrf.mxu0
        %v2091 = vadd.f32 %v2078, %v2090
        %v2092 = vpop.f32.mrf.mxu0
        %2093 = vdwg.mxu0
        %2094 = vmatpush.bf16.msra.mxu0 %v2043
        %2095 = vmatpush.bf16.msra.mxu0 %v2042
        %2096 = vmatpush.bf16.msra.mxu0 %v2041
        %2097 = vmatpush.bf16.msra.mxu0 %v2040
        %2098 = vmatpush.bf16.msra.mxu0 %v2039
        %2099 = vmatpush.bf16.msra.mxu0 %v2038
        %2100 = vmatpush.bf16.msra.mxu0 %v2037
        %2101 = vmatpush.bf16.msra.mxu0 %v2036
        %2102 = vmatmul.bf16.gmra.mxu0 %v1874
        %v2103 = vpop.f32.mrf.mxu0
        %v2104 = vadd.f32 %v2091, %v2103
        %v2105 = vpop.f32.mrf.mxu0
        %2106 = vdwg.mxu0
        %v2107 = vtanh.pop %v2104
        %v2108 = vld [vmem:[%s281] sm:$0xf]
        %v2109 = vadd.f32 %v2107, %v2108
        %v2110 = vmax.f32 %v2109, -1.0
        %v2111 = vmin.f32 %v2110, 1.0
        %v2112 = vsub.f32 %v2111, %v2107
        %v2113 = vmul.f32 %v2112, %v2112
        %v2114 = vmul.f32 %v2113, -0.5
        %v2115 = vsub.f32 %v2114, 0.9189385
        %v2116 = vlaneseq
        %v2117 = vand.u32 %v2116, 127
        %vm2118 = vcmp.lt.s32.totalorder %v2117, 8
        %v2119 = vmul.f32 %v2111, 1.442695
        %v2120 = vpow.pop %v2119
        %v2121 = vsel %vm2118, %v2120, 0.0
        %v2122 = vsel %vm548, %v2121, 0.0
        %2123 = vadd.xlane.f32.xlu0 %v2122
        %v2124 = vpop.xlane.xlu0 %2123
        %v2125 = vrcp.pop %v2124
        %v2126 = vmul.f32 %v2124, %v2125
        %v2127 = vsub.f32 1.0, %v2126
        %v2128 = vmul.f32 %v2125, %v2127
        %v2129 = vadd.f32 %v2125, %v2128
        %vm2130 = vweird.f32 %v2124
        %vm2131 = vweird.f32 %v2125
        %vm2132 = vmor %vm2130, %vm2131
        %v2133 = vsel %vm2132, %v2125, %v2129
        %v2134 = vand.u32 2147483647, %v2124
        %vm2135 = vcmp.eq.f32.partialorder %v2134, 8.507059e+37
        %v2136 = vand.u32 %v2124, 2147483648
        %v2137 = vor.u32 1.1754944e-38, %v2136
        %v2138 = vsel %vm2135, %v2137, %v2133
        %v2139 = vmul.f32 %v2121, %v2138
        %2140 = vst [vmem:[%s286] sm:$0xf] %v2111
        %s2141 = scalar_lea.vmem %s286, 4
        %2142 = vst [vmem:[%s2141] sm:$0xf] %v2115
        %s2143 = scalar_lea.vmem %s286, 8
        %2144 = vst [vmem:[%s2143] sm:$0xf] %v2139
        %p2145 = scmp.lt.s32.totalorder %s18, 1
        %s2146 = scalar_select %p2145, %s18, 1
        %s2147 = smul.addr %s2146, 3
        %s2148 = smul.addr %s2147, 4
        %s2149 = scalar_lea.vmem %s5, %s2148
        // Predicated region
        $region53: #{continuous_actor_forward.1} parent=39 // pred_check
          %p2150 = pneg %p151
        $region54: #{continuous_actor_forward.1} parent=39 // pred_check_branch
          %2152 = sbr.rel (%p2150) target = $region56
        $region55: #{continuous_actor_forward.1} parent=39 // pred_region
          _
        $region56: #{continuous_actor_forward.1} parent=39 // pred_fallthru
          _
      $region40: #{continuous_actor_forward.1} parent=5 // pred_fallthru
        _
      %p2153 = scmp.le.s32.totalorder 2, %s13
      // Predicated region
      $region57: #{continuous_actor_forward.1} parent=5 // pred_check
        %p2154 = pneg %p2153
      $region58: #{continuous_actor_forward.1} parent=5 // pred_check_branch
        %2156 = sbr.rel (%p2154) target = $region60
      $region59: #{continuous_actor_forward.1} parent=5 // pred_region
        %s2157 = ssub.s32 %s13, 2
        // Predicated region
        $region61: #{continuous_actor_forward.1} parent=59 // pred_check
          %p2158 = pneg %p157
        $region62: #{continuous_actor_forward.1} parent=59 // pred_check_branch
          %2160 = sbr.rel (%p2158) target = $region64
        $region63: #{continuous_actor_forward.1} parent=59 // pred_region
          %p2161 = scmp.lt.s32.totalorder %s19, 1
          %s2162 = scalar_select %p2161, %s19, 1
          %s2163 = smul.addr %s2162, 3
          %s2164 = smul.addr %s2163, 4
          %s2165 = scalar_lea.vmem %s5, %s2164
        $region64: #{continuous_actor_forward.1} parent=59 // pred_fallthru
          _
      $region60: #{continuous_actor_forward.1} parent=5 // pred_fallthru
        _
    $region6: #{continuous_actor_forward.1} parent=1 // loop_footer
      %s17 = sadd.s32 1, %s13
    $region7: #{continuous_actor_forward.1} parent=1 // loop_footer_branch
      %12 = sbr.rel target = $region3
    $region8: #{continuous_actor_forward.1} parent=1 // loop_exit
      _
    %2166 = vsyncpa [#allocation3], 1
    %s2167 = scalar_lea.sflag [#allocation3], 1
    %2168 = vsyncpa %s2167, 1
    %2169 = vsyncpa [#allocation5], 1

</llo_original>
